<compile_context>
chip_gen: v7x
topology: tpu7x:2x2x1
jax: 0.10.0
libtpu: 0.0.40
codegen_flags: <defaults>
</compile_context>

<pallas_src>
import math

import jax
import jax.numpy as jnp
from jax.experimental import pallas as pl
from jax.experimental.pallas import tpu as pltpu

KH, KW = 3, 3           # conv kernel size from nn.Conv2d(64, 128, 3)
C_IN, C_OUT = 64, 128
K_DIM = KH * KW * C_IN  # 576
K_PAD = 640             # 576 padded up to a whole number of 128-lane vregs / MXU passes


def _conv3x3_im2col_kernel(x_ref, w_ref, b_ref, o_ref):
    """Fused im2col + single MXU matmul + bias for a 3x3 VALID conv.

    x_ref: (N, H+2, W+2, C_IN)  halo-padded NHWC input, whole array resident in VMEM
    w_ref: (K_PAD, C_OUT)       flattened HWIO weights, zero-padded K 576 -> 640
    b_ref: (1, C_OUT)           bias
    o_ref: (N, H-2, W-2, C_OUT) valid conv output (lane-dense: C_OUT = 128 on lanes)
    """
    n, hp, wp, c = x_ref.shape
    _, h_out, w_out, c_out = o_ref.shape
    hs, ws = hp - KH + 1, wp - KW + 1   # padded position grid == original (H, W), 8-aligned

    x = x_ref[...]

    # 9 static shifted views (pure slices thanks to the zero halo) + one zero tap that
    # pads K from 576 to 640, concatenated along the lane axis -> lane-dense patch rows.
    taps = [x[:, kh:kh + hs, kw:kw + ws, :] for kh in range(KH) for kw in range(KW)]
    k_real = KH * KW * c
    if K_PAD > k_real:
        taps.append(jnp.zeros((n, hs, ws, K_PAD - k_real), x.dtype))
    patches = jnp.concatenate(taps, axis=-1)           # (N, hs, ws, K_PAD)
    # ws is a multiple of 8, K_PAD a multiple of 128 -> this fold is a free tile re-index.
    patches = patches.reshape(n * hs * ws, K_PAD)      # (N*hs*ws, 640)

    # One big MXU matmul, f32 accumulate, bias fused.
    acc = jnp.dot(patches, w_ref[...], preferred_element_type=jnp.float32)
    acc = acc + b_ref[...]                             # (N*hs*ws, C_OUT)

    # Unfold (free, aligned) and drop the KH-1 / KW-1 overhang rows/cols in-register,
    # then store the exact valid output block.
    acc = acc.reshape(n, hs, ws, c_out)[:, :h_out, :w_out, :]
    o_ref[...] = acc.astype(o_ref.dtype)


@jax.jit
def conv2d_3x3_valid(x_nchw, w_mat_padded, bias2d):
    """3x3 VALID conv: NCHW f32 input -> NHWC output via one fused im2col+matmul kernel."""
    n, c_in, h, w = x_nchw.shape
    assert c_in == C_IN
    # The in-kernel patch fold requires the W axis (second-minor of the patch tensor)
    # to be sublane (8) aligned; true for the 16x16 demo shape.
    assert w % 8 == 0, "spatial W must be a multiple of 8 for the aligned in-kernel fold"
    h_out, w_out = h - KH + 1, w - KW + 1
    c_out = w_mat_padded.shape[-1]
    hp, wp = h + KH - 1, w + KW - 1

    # Layout + zero halo in one tiny XLA fusion (~145 KB): NCHW -> NHWC, pad (KH-1, KW-1)
    # so every 3x3 tap inside the kernel is a pure static slice (no OOB, no H/W concat).
    x_nhwc = jnp.transpose(x_nchw, (0, 2, 3, 1))
    x_halo = jnp.pad(x_nhwc, ((0, 0), (0, KH - 1), (0, KW - 1), (0, 0)))

    itemsize = jnp.dtype(x_nchw.dtype).itemsize
    flops = 2 * (n * h * w) * K_PAD * c_out
    bytes_accessed = (
        x_halo.size + w_mat_padded.size + bias2d.size + n * h_out * w_out * c_out
    ) * itemsize

    return pl.pallas_call(
        _conv3x3_im2col_kernel,
        out_shape=jax.ShapeDtypeStruct((n, h_out, w_out, c_out), x_nchw.dtype),
        grid=(1,),
        in_specs=[
            pl.BlockSpec((n, hp, wp, c_in), lambda i: (0, 0, 0, 0)),
            pl.BlockSpec((K_PAD, c_out), lambda i: (0, 0)),
            pl.BlockSpec((1, c_out), lambda i: (0, 0)),
        ],
        out_specs=pl.BlockSpec((n, h_out, w_out, c_out), lambda i: (0, 0, 0, 0)),
        cost_estimate=pl.CostEstimate(
            flops=flops, transcendentals=0, bytes_accessed=bytes_accessed
        ),
        compiler_params=pltpu.CompilerParams(dimension_semantics=("arbitrary",)),
    )(x_halo, w_mat_padded, bias2d)


class PositionalEncodingPallas:
    """JAX/Pallas port of the PyTorch PositionalEncoding module."""

    def __init__(self, d_model, prob, max_len=5001, key=jax.random.PRNGKey(42)):
        self.d_model = d_model
        self.prob = prob
        self.max_len = max_len

        # pe = zeros; pe[:, 1:2] = sin(pe * pe) = sin(0) = 0  -> stays all zeros.
        self.pe = jnp.zeros((max_len, d_model), dtype=jnp.float32)

        # nn.Conv2d(64, 128, 3) parameters, deterministic init (kaiming-uniform-like).
        # TODO(synk): to match a real torch checkpoint, import its OIHW weights and
        # transpose to HWIO here.
        k_w, k_b = jax.random.split(key)
        fan_in = C_IN * KH * KW
        bound = 1.0 / math.sqrt(fan_in)
        self.conv_w = jax.random.uniform(
            k_w, (KH, KW, C_IN, C_OUT), dtype=jnp.float32, minval=-bound, maxval=bound
        )
        self.conv_b = jax.random.uniform(
            k_b, (C_OUT,), dtype=jnp.float32, minval=-bound, maxval=bound
        )

        # One-time weight prep for the kernel: flatten HWIO -> (576, 128) with (kh, kw, c)
        # minor ordering (matches the in-kernel tap concat), then zero-pad K to 640 so the
        # padded zero tap contributes nothing.
        w_mat = self.conv_w.reshape(K_DIM, C_OUT)
        self.w_mat_padded = jnp.concatenate(
            [w_mat, jnp.zeros((K_PAD - K_DIM, C_OUT), dtype=w_mat.dtype)], axis=0
        )
        self.bias2d = self.conv_b.reshape(1, C_OUT)

    def __call__(self, x_nchw, idx):
        # Conv hot path in Pallas.  Input is NCHW (PyTorch layout); compute in NHWC so
        # C_out rides the 128-lane axis.  The original forward discards the conv value
        # (returns None), so we return NHWC and skip the NHWC->NCHW transpose.
        conv_nhwc = conv2d_3x3_valid(x_nchw, self.w_mat_padded, self.bias2d)

        # The subsequent `test = torch.arange(...)` lines just overwrite `test`;
        # trivial glue, no Pallas needed.
        test = jnp.arange(2)
        test = jnp.arange(1, 3)
        test = jnp.arange(1.0, 10.5, 0.8)

        # PyTorch forward returns None; we return the computed tensors for inspection.
        return conv_nhwc, test


if __name__ == "__main__":
    key = jax.random.PRNGKey(0)
    kx, ki = jax.random.split(key)

    # Conv2d requires 64 input channels; small spatial size 16x16, batch 2.
    x = jax.random.normal(kx, (2, C_IN, 16, 16), dtype=jnp.float32)
    idx = jax.random.randint(ki, (2,), 0, 5001, dtype=jnp.int32)

    module = PositionalEncodingPallas(d_model=32, prob=0.1)
    conv_out, test = module(x, idx)
    conv_out = jax.block_until_ready(conv_out)

    # Sanity check against plain-JAX conv (NHWC reference, no extra transposes).
    x_nhwc = jnp.transpose(x, (0, 2, 3, 1))
    ref = jax.lax.conv_general_dilated(
        x_nhwc,
        module.conv_w,                         # HWIO
        window_strides=(1, 1),
        padding="VALID",
        dimension_numbers=("NHWC", "HWIO", "NHWC"),
    ) + module.conv_b.reshape(1, 1, 1, -1)

    assert conv_out.shape == (2, 14, 14, C_OUT), conv_out.shape
    assert jnp.allclose(conv_out, ref, atol=1e-4, rtol=1e-4)

    print("KERNEL_OK")
</pallas_src>

<mosaic_0001>
module attributes {stable_mosaic.version = 11 : i64} {
  func.func @_conv3x3_im2col_kernel(%arg0: i32, %arg1: memref<2x18x18x64xf32, #tpu.memory_space<vmem>>, %arg2: memref<640x128xf32, #tpu.memory_space<vmem>>, %arg3: memref<1x128xf32, #tpu.memory_space<vmem>>, %arg4: memref<2x14x14x128xf32, #tpu.memory_space<vmem>>) attributes {dimension_semantics = [#tpu.dimension_semantics<arbitrary>], iteration_bounds = array<i64: 1>, scalar_prefetch = 0 : i64, scratch_operands = 0 : i64, tpu.core_type = #tpu.core_type<tc>, window_params = [{pipeline_mode = #tpu.pipeline_mode<synchronous>, transform_indices = @transform_0, window_bounds = array<i64: 2, 18, 18, 64>}, {pipeline_mode = #tpu.pipeline_mode<synchronous>, transform_indices = @transform_1, window_bounds = array<i64: 640, 128>}, {pipeline_mode = #tpu.pipeline_mode<synchronous>, transform_indices = @transform_2, window_bounds = array<i64: 1, 128>}, {pipeline_mode = #tpu.pipeline_mode<synchronous>, transform_indices = @transform_3, window_bounds = array<i64: 2, 14, 14, 128>}]} {
    %c0 = arith.constant 0 : index
    %c0_0 = arith.constant 0 : index
    %c0_1 = arith.constant 0 : index
    %c0_2 = arith.constant 0 : index
    %0 = vector.load %arg1[%c0, %c0_0, %c0_1, %c0_2] : memref<2x18x18x64xf32, #tpu.memory_space<vmem>>, vector<2x18x18x64xf32>
    %1 = vector.extract_strided_slice %0 {offsets = [0, 0, 0, 0], sizes = [2, 16, 16, 64], strides = [1, 1, 1, 1]} : vector<2x18x18x64xf32> to vector<2x16x16x64xf32>
    %2 = vector.extract_strided_slice %0 {offsets = [0, 0, 1, 0], sizes = [2, 16, 16, 64], strides = [1, 1, 1, 1]} : vector<2x18x18x64xf32> to vector<2x16x16x64xf32>
    %3 = vector.extract_strided_slice %0 {offsets = [0, 0, 2, 0], sizes = [2, 16, 16, 64], strides = [1, 1, 1, 1]} : vector<2x18x18x64xf32> to vector<2x16x16x64xf32>
    %4 = vector.extract_strided_slice %0 {offsets = [0, 1, 0, 0], sizes = [2, 16, 16, 64], strides = [1, 1, 1, 1]} : vector<2x18x18x64xf32> to vector<2x16x16x64xf32>
    %5 = vector.extract_strided_slice %0 {offsets = [0, 1, 1, 0], sizes = [2, 16, 16, 64], strides = [1, 1, 1, 1]} : vector<2x18x18x64xf32> to vector<2x16x16x64xf32>
    %6 = vector.extract_strided_slice %0 {offsets = [0, 1, 2, 0], sizes = [2, 16, 16, 64], strides = [1, 1, 1, 1]} : vector<2x18x18x64xf32> to vector<2x16x16x64xf32>
    %7 = vector.extract_strided_slice %0 {offsets = [0, 2, 0, 0], sizes = [2, 16, 16, 64], strides = [1, 1, 1, 1]} : vector<2x18x18x64xf32> to vector<2x16x16x64xf32>
    %8 = vector.extract_strided_slice %0 {offsets = [0, 2, 1, 0], sizes = [2, 16, 16, 64], strides = [1, 1, 1, 1]} : vector<2x18x18x64xf32> to vector<2x16x16x64xf32>
    %9 = vector.extract_strided_slice %0 {offsets = [0, 2, 2, 0], sizes = [2, 16, 16, 64], strides = [1, 1, 1, 1]} : vector<2x18x18x64xf32> to vector<2x16x16x64xf32>
    %cst = arith.constant 0.000000e+00 : f32
    %10 = vector.broadcast %cst : f32 to vector<2x16x16x64xf32>
    %11 = tpu.concatenate %1, %2, %3, %4, %5, %6, %7, %8, %9, %10 in 3 : vector<2x16x16x64xf32>, vector<2x16x16x64xf32>, vector<2x16x16x64xf32>, vector<2x16x16x64xf32>, vector<2x16x16x64xf32>, vector<2x16x16x64xf32>, vector<2x16x16x64xf32>, vector<2x16x16x64xf32>, vector<2x16x16x64xf32>, vector<2x16x16x64xf32> -> vector<2x16x16x640xf32>
    %12 = vector.shape_cast %11 : vector<2x16x16x640xf32> to vector<512x640xf32>
    %c0_3 = arith.constant 0 : index
    %c0_4 = arith.constant 0 : index
    %13 = vector.load %arg2[%c0_3, %c0_4] : memref<640x128xf32, #tpu.memory_space<vmem>>, vector<640x128xf32>
    %cst_5 = arith.constant dense<0.000000e+00> : vector<512x128xf32>
    %14 = tpu.matmul %12, %13, %cst_5 {dimension_numbers = #tpu.dot_dimension_numbers<[1], [0], [0], [1], [0, 0, 1, 1], [], []>} : vector<512x640xf32>, vector<640x128xf32>, vector<512x128xf32> -> vector<512x128xf32>
    %c0_6 = arith.constant 0 : index
    %c0_7 = arith.constant 0 : index
    %15 = vector.load %arg3[%c0_6, %c0_7] : memref<1x128xf32, #tpu.memory_space<vmem>>, vector<1x128xf32>
    %16 = vector.broadcast %15 : vector<1x128xf32> to vector<512x128xf32>
    %17 = arith.addf %14, %16 : vector<512x128xf32>
    %18 = vector.shape_cast %17 : vector<512x128xf32> to vector<2x16x16x128xf32>
    %19 = vector.extract_strided_slice %18 {offsets = [0, 0, 0, 0], sizes = [2, 14, 14, 128], strides = [1, 1, 1, 1]} : vector<2x16x16x128xf32> to vector<2x14x14x128xf32>
    %c0_8 = arith.constant 0 : index
    %c0_9 = arith.constant 0 : index
    %c0_10 = arith.constant 0 : index
    %c0_11 = arith.constant 0 : index
    %20 = vector.load %arg4[%c0_8, %c0_9, %c0_10, %c0_11] : memref<2x14x14x128xf32, #tpu.memory_space<vmem>>, vector<2x14x14x128xf32>
    tpu.vector_store %arg4[%c0_8, %c0_9, %c0_10, %c0_11], %19 {strides = array<i32>} : memref<2x14x14x128xf32, #tpu.memory_space<vmem>>, vector<2x14x14x128xf32>,
    return
  }
  func.func @transform_0(%arg0: i32) -> (i32, i32, i32, i32) {
    %c0_i32 = arith.constant 0 : i32
    %c0_i32_0 = arith.constant 0 : i32
    %c0_i32_1 = arith.constant 0 : i32
    %c0_i32_2 = arith.constant 0 : i32
    %c0_i32_3 = arith.constant 0 : i32
    return %c0_i32, %c0_i32_0, %c0_i32_1, %c0_i32_2 : i32, i32, i32, i32
  }
  func.func @transform_1(%arg0: i32) -> (i32, i32) {
    %c0_i32 = arith.constant 0 : i32
    %c0_i32_0 = arith.constant 0 : i32
    %c0_i32_1 = arith.constant 0 : i32
    return %c0_i32, %c0_i32_0 : i32, i32
  }
  func.func @transform_2(%arg0: i32) -> (i32, i32) {
    %c0_i32 = arith.constant 0 : i32
    %c0_i32_0 = arith.constant 0 : i32
    %c0_i32_1 = arith.constant 0 : i32
    return %c0_i32, %c0_i32_0 : i32, i32
  }
  func.func @transform_3(%arg0: i32) -> (i32, i32, i32, i32) {
    %c0_i32 = arith.constant 0 : i32
    %c0_i32_0 = arith.constant 0 : i32
    %c0_i32_1 = arith.constant 0 : i32
    %c0_i32_2 = arith.constant 0 : i32
    %c0_i32_3 = arith.constant 0 : i32
    return %c0_i32, %c0_i32_0, %c0_i32_1, %c0_i32_2 : i32, i32, i32, i32
  }
}

</mosaic_0001>

<llo_original>
// kernel: conv2d_3x3_valid.1
$region0: #{conv2d_3x3_valid.1}
  #allocation0 [shape = 'u32[]', space=smem, size = 0x4, offset = 0x4, fixed_abs, tag = 'smem constant byte address 0x4 - core index']
  #allocation1 [shape = 'u32[144,128]{1,0:T(1,128)}', space=vmem, size = 0x12000, scoped, tag = 'internal scratch']
  %s0 = inlined_call_operand.vmem [shape: f32[2,18,18,64], index: 0, kind: input, shape index: {}]
  %s1 = inlined_call_operand.vmem [shape: f32[640,128], index: 1, kind: input, shape index: {}]
  %s2 = inlined_call_operand.vmem [shape: f32[1,128], index: 2, kind: input, shape index: {}]
  %s3 = inlined_call_operand.vmem [shape: f32[2,14,14,128], index: 3, kind: output, shape index: {}]
  %s4 = sld [smem:[#allocation0]]
  $region22: #{conv2d_3x3_valid.1} parent=0
    _
  %s6 = ssub.s32 1, %s4
  %s7 = scalar_select 0, %s6, %s4
  // Predicated region
  $region2: #{conv2d_3x3_valid.1} parent=0 // pred_check
    _
  $region3: #{conv2d_3x3_valid.1} parent=0 // pred_check_branch
    %9 = sbr.rel (0) target = $region5
  $region4: #{conv2d_3x3_valid.1} parent=0 // pred_region
    _
  $region5: #{conv2d_3x3_valid.1} parent=0 // pred_fallthru
    _
  // Predicated region
  $region6: #{conv2d_3x3_valid.1} parent=0 // pred_check
    _
  $region7: #{conv2d_3x3_valid.1} parent=0 // pred_check_branch
    %11 = sbr.rel (0) target = $region9
  $region8: #{conv2d_3x3_valid.1} parent=0 // pred_region
    _
  $region9: #{conv2d_3x3_valid.1} parent=0 // pred_fallthru
    _
  // Predicated region
  $region10: #{conv2d_3x3_valid.1} parent=0 // pred_check
    _
  $region11: #{conv2d_3x3_valid.1} parent=0 // pred_check_branch
    %13 = sbr.rel (0) target = $region13
  $region12: #{conv2d_3x3_valid.1} parent=0 // pred_region
    _
  $region13: #{conv2d_3x3_valid.1} parent=0 // pred_fallthru
    _
  %v14 = vld [vmem:[%s0] sm:$0xff]
  %v15 = vld [vmem:[%s0 + $0x8] sm:$0xff]
  %v16 = vld [vmem:[%s0 + $0x10] sm:$0x3]
  %v17 = vld [vmem:[%s0 + $0x18] sm:$0xff]
  %v18 = vld [vmem:[%s0 + $0x20] sm:$0xff]
  %v19 = vld [vmem:[%s0 + $0x28] sm:$0x3]
  %v20 = vld [vmem:[%s0 + $0x30] sm:$0xff]
  %v21 = vld [vmem:[%s0 + $0x38] sm:$0xff]
  %v22 = vld [vmem:[%s0 + $0x40] sm:$0x3]
  %v23 = vld [vmem:[%s0 + $0x48] sm:$0xff]
  %v24 = vld [vmem:[%s0 + $0x50] sm:$0xff]
  %v25 = vld [vmem:[%s0 + $0x58] sm:$0x3]
  %v26 = vld [vmem:[%s0 + $0x60] sm:$0xff]
  %v27 = vld [vmem:[%s0 + $0x68] sm:$0xff]
  %v28 = vld [vmem:[%s0 + $0x70] sm:$0x3]
  %v29 = vld [vmem:[%s0 + $0x78] sm:$0xff]
  %v30 = vld [vmem:[%s0 + $0x80] sm:$0xff]
  %v31 = vld [vmem:[%s0 + $0x88] sm:$0x3]
  %v32 = vld [vmem:[%s0 + $0x90] sm:$0xff]
  %v33 = vld [vmem:[%s0 + $0x98] sm:$0xff]
  %v34 = vld [vmem:[%s0 + $0xa0] sm:$0x3]
  %v35 = vld [vmem:[%s0 + $0xa8] sm:$0xff]
  %v36 = vld [vmem:[%s0 + $0xb0] sm:$0xff]
  %v37 = vld [vmem:[%s0 + $0xb8] sm:$0x3]
  %v38 = vld [vmem:[%s0 + $0xc0] sm:$0xff]
  %v39 = vld [vmem:[%s0 + $0xc8] sm:$0xff]
  %v40 = vld [vmem:[%s0 + $0xd0] sm:$0x3]
  %v41 = vld [vmem:[%s0 + $0xd8] sm:$0xff]
  %v42 = vld [vmem:[%s0 + $0xe0] sm:$0xff]
  %v43 = vld [vmem:[%s0 + $0xe8] sm:$0x3]
  %v44 = vld [vmem:[%s0 + $0xf0] sm:$0xff]
  %v45 = vld [vmem:[%s0 + $0xf8] sm:$0xff]
  %v46 = vld [vmem:[%s0 + $0x100] sm:$0x3]
  %v47 = vld [vmem:[%s0 + $0x108] sm:$0xff]
  %v48 = vld [vmem:[%s0 + $0x110] sm:$0xff]
  %v49 = vld [vmem:[%s0 + $0x118] sm:$0x3]
  %v50 = vld [vmem:[%s0 + $0x120] sm:$0xff]
  %v51 = vld [vmem:[%s0 + $0x128] sm:$0xff]
  %v52 = vld [vmem:[%s0 + $0x130] sm:$0x3]
  %v53 = vld [vmem:[%s0 + $0x138] sm:$0xff]
  %v54 = vld [vmem:[%s0 + $0x140] sm:$0xff]
  %v55 = vld [vmem:[%s0 + $0x148] sm:$0x3]
  %v56 = vld [vmem:[%s0 + $0x150] sm:$0xff]
  %v57 = vld [vmem:[%s0 + $0x158] sm:$0xff]
  %v58 = vld [vmem:[%s0 + $0x160] sm:$0x3]
  %v59 = vld [vmem:[%s0 + $0x168] sm:$0xff]
  %v60 = vld [vmem:[%s0 + $0x170] sm:$0xff]
  %v61 = vld [vmem:[%s0 + $0x178] sm:$0x3]
  %v62 = vld [vmem:[%s0 + $0x180] sm:$0xff]
  %v63 = vld [vmem:[%s0 + $0x188] sm:$0xff]
  %v64 = vld [vmem:[%s0 + $0x190] sm:$0x3]
  %v65 = vld [vmem:[%s0 + $0x198] sm:$0xff]
  %v66 = vld [vmem:[%s0 + $0x1a0] sm:$0xff]
  %v67 = vld [vmem:[%s0 + $0x1a8] sm:$0x3]
  %v68 = vld [vmem:[%s0 + $0x1b0] sm:$0xff]
  %v69 = vld [vmem:[%s0 + $0x1b8] sm:$0xff]
  %v70 = vld [vmem:[%s0 + $0x1c0] sm:$0x3]
  %v71 = vld [vmem:[%s0 + $0x1c8] sm:$0xff]
  %v72 = vld [vmem:[%s0 + $0x1d0] sm:$0xff]
  %v73 = vld [vmem:[%s0 + $0x1d8] sm:$0x3]
  %v74 = vld [vmem:[%s0 + $0x1e0] sm:$0xff]
  %v75 = vld [vmem:[%s0 + $0x1e8] sm:$0xff]
  %v76 = vld [vmem:[%s0 + $0x1f0] sm:$0x3]
  %v77 = vld [vmem:[%s0 + $0x1f8] sm:$0xff]
  %v78 = vld [vmem:[%s0 + $0x200] sm:$0xff]
  %v79 = vld [vmem:[%s0 + $0x208] sm:$0x3]
  %v80 = vld [vmem:[%s0 + $0x210] sm:$0xff]
  %v81 = vld [vmem:[%s0 + $0x218] sm:$0xff]
  %v82 = vld [vmem:[%s0 + $0x220] sm:$0x3]
  %v83 = vld [vmem:[%s0 + $0x228] sm:$0xff]
  %v84 = vld [vmem:[%s0 + $0x230] sm:$0xff]
  %v85 = vld [vmem:[%s0 + $0x238] sm:$0x3]
  %v86 = vld [vmem:[%s0 + $0x240] sm:$0xff]
  %v87 = vld [vmem:[%s0 + $0x248] sm:$0xff]
  %v88 = vld [vmem:[%s0 + $0x250] sm:$0x3]
  %v89 = vld [vmem:[%s0 + $0x258] sm:$0xff]
  %v90 = vld [vmem:[%s0 + $0x260] sm:$0xff]
  %v91 = vld [vmem:[%s0 + $0x268] sm:$0x3]
  %v92 = vld [vmem:[%s0 + $0x270] sm:$0xff]
  %v93 = vld [vmem:[%s0 + $0x278] sm:$0xff]
  %v94 = vld [vmem:[%s0 + $0x280] sm:$0x3]
  %v95 = vld [vmem:[%s0 + $0x288] sm:$0xff]
  %v96 = vld [vmem:[%s0 + $0x290] sm:$0xff]
  %v97 = vld [vmem:[%s0 + $0x298] sm:$0x3]
  %v98 = vld [vmem:[%s0 + $0x2a0] sm:$0xff]
  %v99 = vld [vmem:[%s0 + $0x2a8] sm:$0xff]
  %v100 = vld [vmem:[%s0 + $0x2b0] sm:$0x3]
  %v101 = vld [vmem:[%s0 + $0x2b8] sm:$0xff]
  %v102 = vld [vmem:[%s0 + $0x2c0] sm:$0xff]
  %v103 = vld [vmem:[%s0 + $0x2c8] sm:$0x3]
  %v104 = vld [vmem:[%s0 + $0x2d0] sm:$0xff]
  %v105 = vld [vmem:[%s0 + $0x2d8] sm:$0xff]
  %v106 = vld [vmem:[%s0 + $0x2e0] sm:$0x3]
  %v107 = vld [vmem:[%s0 + $0x2e8] sm:$0xff]
  %v108 = vld [vmem:[%s0 + $0x2f0] sm:$0xff]
  %v109 = vld [vmem:[%s0 + $0x2f8] sm:$0x3]
  %v110 = vld [vmem:[%s0 + $0x300] sm:$0xff]
  %v111 = vld [vmem:[%s0 + $0x308] sm:$0xff]
  %v112 = vld [vmem:[%s0 + $0x310] sm:$0x3]
  %v113 = vld [vmem:[%s0 + $0x318] sm:$0xff]
  %v114 = vld [vmem:[%s0 + $0x320] sm:$0xff]
  %v115 = vld [vmem:[%s0 + $0x328] sm:$0x3]
  %v116 = vld [vmem:[%s0 + $0x330] sm:$0xff]
  %v117 = vld [vmem:[%s0 + $0x338] sm:$0xff]
  %v118 = vld [vmem:[%s0 + $0x340] sm:$0x3]
  %v119 = vld [vmem:[%s0 + $0x348] sm:$0xff]
  %v120 = vld [vmem:[%s0 + $0x350] sm:$0xff]
  %v121 = vld [vmem:[%s0 + $0x358] sm:$0x3]
  %vm218 = vcmask 1046528
  %v219 = vrot.slane %v14, 1
  %v220 = vrot.slane %v15, 1
  %v221 = vsel %vm218, %v219, %v220
  %v222 = vrot.slane %v16, 1
  %v223 = vsel %vm218, %v220, %v222
  %v224 = vrot.slane %v17, 1
  %v225 = vrot.slane %v18, 1
  %v226 = vsel %vm218, %v224, %v225
  %v227 = vrot.slane %v19, 1
  %v228 = vsel %vm218, %v225, %v227
  %v229 = vrot.slane %v20, 1
  %v230 = vrot.slane %v21, 1
  %v231 = vsel %vm218, %v229, %v230
  %v232 = vrot.slane %v22, 1
  %v233 = vsel %vm218, %v230, %v232
  %v234 = vrot.slane %v23, 1
  %v235 = vrot.slane %v24, 1
  %v236 = vsel %vm218, %v234, %v235
  %v237 = vrot.slane %v25, 1
  %v238 = vsel %vm218, %v235, %v237
  %v239 = vrot.slane %v26, 1
  %v240 = vrot.slane %v27, 1
  %v241 = vsel %vm218, %v239, %v240
  %v242 = vrot.slane %v28, 1
  %v243 = vsel %vm218, %v240, %v242
  %v244 = vrot.slane %v29, 1
  %v245 = vrot.slane %v30, 1
  %v246 = vsel %vm218, %v244, %v245
  %v247 = vrot.slane %v31, 1
  %v248 = vsel %vm218, %v245, %v247
  %v249 = vrot.slane %v32, 1
  %v250 = vrot.slane %v33, 1
  %v251 = vsel %vm218, %v249, %v250
  %v252 = vrot.slane %v34, 1
  %v253 = vsel %vm218, %v250, %v252
  %v254 = vrot.slane %v35, 1
  %v255 = vrot.slane %v36, 1
  %v256 = vsel %vm218, %v254, %v255
  %v257 = vrot.slane %v37, 1
  %v258 = vsel %vm218, %v255, %v257
  %v259 = vrot.slane %v38, 1
  %v260 = vrot.slane %v39, 1
  %v261 = vsel %vm218, %v259, %v260
  %v262 = vrot.slane %v40, 1
  %v263 = vsel %vm218, %v260, %v262
  %v264 = vrot.slane %v41, 1
  %v265 = vrot.slane %v42, 1
  %v266 = vsel %vm218, %v264, %v265
  %v267 = vrot.slane %v43, 1
  %v268 = vsel %vm218, %v265, %v267
  %v269 = vrot.slane %v44, 1
  %v270 = vrot.slane %v45, 1
  %v271 = vsel %vm218, %v269, %v270
  %v272 = vrot.slane %v46, 1
  %v273 = vsel %vm218, %v270, %v272
  %v274 = vrot.slane %v47, 1
  %v275 = vrot.slane %v48, 1
  %v276 = vsel %vm218, %v274, %v275
  %v277 = vrot.slane %v49, 1
  %v278 = vsel %vm218, %v275, %v277
  %v279 = vrot.slane %v50, 1
  %v280 = vrot.slane %v51, 1
  %v281 = vsel %vm218, %v279, %v280
  %v282 = vrot.slane %v52, 1
  %v283 = vsel %vm218, %v280, %v282
  %v284 = vrot.slane %v53, 1
  %v285 = vrot.slane %v54, 1
  %v286 = vsel %vm218, %v284, %v285
  %v287 = vrot.slane %v55, 1
  %v288 = vsel %vm218, %v285, %v287
  %v289 = vrot.slane %v56, 1
  %v290 = vrot.slane %v57, 1
  %v291 = vsel %vm218, %v289, %v290
  %v292 = vrot.slane %v58, 1
  %v293 = vsel %vm218, %v290, %v292
  %v294 = vrot.slane %v59, 1
  %v295 = vrot.slane %v60, 1
  %v296 = vsel %vm218, %v294, %v295
  %v297 = vrot.slane %v61, 1
  %v298 = vsel %vm218, %v295, %v297
  %v299 = vrot.slane %v68, 1
  %v300 = vrot.slane %v69, 1
  %v301 = vsel %vm218, %v299, %v300
  %v302 = vrot.slane %v70, 1
  %v303 = vsel %vm218, %v300, %v302
  %v304 = vrot.slane %v71, 1
  %v305 = vrot.slane %v72, 1
  %v306 = vsel %vm218, %v304, %v305
  %v307 = vrot.slane %v73, 1
  %v308 = vsel %vm218, %v305, %v307
  %v309 = vrot.slane %v74, 1
  %v310 = vrot.slane %v75, 1
  %v311 = vsel %vm218, %v309, %v310
  %v312 = vrot.slane %v76, 1
  %v313 = vsel %vm218, %v310, %v312
  %v314 = vrot.slane %v77, 1
  %v315 = vrot.slane %v78, 1
  %v316 = vsel %vm218, %v314, %v315
  %v317 = vrot.slane %v79, 1
  %v318 = vsel %vm218, %v315, %v317
  %v319 = vrot.slane %v80, 1
  %v320 = vrot.slane %v81, 1
  %v321 = vsel %vm218, %v319, %v320
  %v322 = vrot.slane %v82, 1
  %v323 = vsel %vm218, %v320, %v322
  %v324 = vrot.slane %v83, 1
  %v325 = vrot.slane %v84, 1
  %v326 = vsel %vm218, %v324, %v325
  %v327 = vrot.slane %v85, 1
  %v328 = vsel %vm218, %v325, %v327
  %v329 = vrot.slane %v86, 1
  %v330 = vrot.slane %v87, 1
  %v331 = vsel %vm218, %v329, %v330
  %v332 = vrot.slane %v88, 1
  %v333 = vsel %vm218, %v330, %v332
  %v334 = vrot.slane %v89, 1
  %v335 = vrot.slane %v90, 1
  %v336 = vsel %vm218, %v334, %v335
  %v337 = vrot.slane %v91, 1
  %v338 = vsel %vm218, %v335, %v337
  %v339 = vrot.slane %v92, 1
  %v340 = vrot.slane %v93, 1
  %v341 = vsel %vm218, %v339, %v340
  %v342 = vrot.slane %v94, 1
  %v343 = vsel %vm218, %v340, %v342
  %v344 = vrot.slane %v95, 1
  %v345 = vrot.slane %v96, 1
  %v346 = vsel %vm218, %v344, %v345
  %v347 = vrot.slane %v97, 1
  %v348 = vsel %vm218, %v345, %v347
  %v349 = vrot.slane %v98, 1
  %v350 = vrot.slane %v99, 1
  %v351 = vsel %vm218, %v349, %v350
  %v352 = vrot.slane %v100, 1
  %v353 = vsel %vm218, %v350, %v352
  %v354 = vrot.slane %v101, 1
  %v355 = vrot.slane %v102, 1
  %v356 = vsel %vm218, %v354, %v355
  %v357 = vrot.slane %v103, 1
  %v358 = vsel %vm218, %v355, %v357
  %v359 = vrot.slane %v104, 1
  %v360 = vrot.slane %v105, 1
  %v361 = vsel %vm218, %v359, %v360
  %v362 = vrot.slane %v106, 1
  %v363 = vsel %vm218, %v360, %v362
  %v364 = vrot.slane %v107, 1
  %v365 = vrot.slane %v108, 1
  %v366 = vsel %vm218, %v364, %v365
  %v367 = vrot.slane %v109, 1
  %v368 = vsel %vm218, %v365, %v367
  %v369 = vrot.slane %v110, 1
  %v370 = vrot.slane %v111, 1
  %v371 = vsel %vm218, %v369, %v370
  %v372 = vrot.slane %v112, 1
  %v373 = vsel %vm218, %v370, %v372
  %v374 = vrot.slane %v113, 1
  %v375 = vrot.slane %v114, 1
  %v376 = vsel %vm218, %v374, %v375
  %v377 = vrot.slane %v115, 1
  %v378 = vsel %vm218, %v375, %v377
  %379 = vrot.lane.b32.xlu0 %v221, 64
  %v380 = vpop.permute.xlu0 %379
  %381 = vrot.lane.b32.xlu0 %v223, 64
  %v382 = vpop.permute.xlu0 %381
  %383 = vrot.lane.b32.xlu0 %v226, 64
  %v384 = vpop.permute.xlu0 %383
  %385 = vrot.lane.b32.xlu0 %v228, 64
  %v386 = vpop.permute.xlu0 %385
  %387 = vrot.lane.b32.xlu0 %v231, 64
  %v388 = vpop.permute.xlu0 %387
  %389 = vrot.lane.b32.xlu0 %v233, 64
  %v390 = vpop.permute.xlu0 %389
  %391 = vrot.lane.b32.xlu0 %v236, 64
  %v392 = vpop.permute.xlu0 %391
  %393 = vrot.lane.b32.xlu0 %v238, 64
  %v394 = vpop.permute.xlu0 %393
  %395 = vrot.lane.b32.xlu0 %v241, 64
  %v396 = vpop.permute.xlu0 %395
  %397 = vrot.lane.b32.xlu0 %v243, 64
  %v398 = vpop.permute.xlu0 %397
  %399 = vrot.lane.b32.xlu0 %v246, 64
  %v400 = vpop.permute.xlu0 %399
  %401 = vrot.lane.b32.xlu0 %v248, 64
  %v402 = vpop.permute.xlu0 %401
  %403 = vrot.lane.b32.xlu0 %v251, 64
  %v404 = vpop.permute.xlu0 %403
  %405 = vrot.lane.b32.xlu0 %v253, 64
  %v406 = vpop.permute.xlu0 %405
  %407 = vrot.lane.b32.xlu0 %v256, 64
  %v408 = vpop.permute.xlu0 %407
  %409 = vrot.lane.b32.xlu0 %v258, 64
  %v410 = vpop.permute.xlu0 %409
  %411 = vrot.lane.b32.xlu0 %v261, 64
  %v412 = vpop.permute.xlu0 %411
  %413 = vrot.lane.b32.xlu0 %v263, 64
  %v414 = vpop.permute.xlu0 %413
  %415 = vrot.lane.b32.xlu0 %v266, 64
  %v416 = vpop.permute.xlu0 %415
  %417 = vrot.lane.b32.xlu0 %v268, 64
  %v418 = vpop.permute.xlu0 %417
  %419 = vrot.lane.b32.xlu0 %v271, 64
  %v420 = vpop.permute.xlu0 %419
  %421 = vrot.lane.b32.xlu0 %v273, 64
  %v422 = vpop.permute.xlu0 %421
  %423 = vrot.lane.b32.xlu0 %v276, 64
  %v424 = vpop.permute.xlu0 %423
  %425 = vrot.lane.b32.xlu0 %v278, 64
  %v426 = vpop.permute.xlu0 %425
  %427 = vrot.lane.b32.xlu0 %v281, 64
  %v428 = vpop.permute.xlu0 %427
  %429 = vrot.lane.b32.xlu0 %v283, 64
  %v430 = vpop.permute.xlu0 %429
  %431 = vrot.lane.b32.xlu0 %v286, 64
  %v432 = vpop.permute.xlu0 %431
  %433 = vrot.lane.b32.xlu0 %v288, 64
  %v434 = vpop.permute.xlu0 %433
  %435 = vrot.lane.b32.xlu0 %v291, 64
  %v436 = vpop.permute.xlu0 %435
  %437 = vrot.lane.b32.xlu0 %v293, 64
  %v438 = vpop.permute.xlu0 %437
  %439 = vrot.lane.b32.xlu0 %v296, 64
  %v440 = vpop.permute.xlu0 %439
  %441 = vrot.lane.b32.xlu0 %v298, 64
  %v442 = vpop.permute.xlu0 %441
  %443 = vrot.lane.b32.xlu0 %v301, 64
  %v444 = vpop.permute.xlu0 %443
  %445 = vrot.lane.b32.xlu0 %v303, 64
  %v446 = vpop.permute.xlu0 %445
  %447 = vrot.lane.b32.xlu0 %v306, 64
  %v448 = vpop.permute.xlu0 %447
  %449 = vrot.lane.b32.xlu0 %v308, 64
  %v450 = vpop.permute.xlu0 %449
  %451 = vrot.lane.b32.xlu0 %v311, 64
  %v452 = vpop.permute.xlu0 %451
  %453 = vrot.lane.b32.xlu0 %v313, 64
  %v454 = vpop.permute.xlu0 %453
  %455 = vrot.lane.b32.xlu0 %v316, 64
  %v456 = vpop.permute.xlu0 %455
  %457 = vrot.lane.b32.xlu0 %v318, 64
  %v458 = vpop.permute.xlu0 %457
  %459 = vrot.lane.b32.xlu0 %v321, 64
  %v460 = vpop.permute.xlu0 %459
  %461 = vrot.lane.b32.xlu0 %v323, 64
  %v462 = vpop.permute.xlu0 %461
  %463 = vrot.lane.b32.xlu0 %v326, 64
  %v464 = vpop.permute.xlu0 %463
  %465 = vrot.lane.b32.xlu0 %v328, 64
  %v466 = vpop.permute.xlu0 %465
  %467 = vrot.lane.b32.xlu0 %v331, 64
  %v468 = vpop.permute.xlu0 %467
  %469 = vrot.lane.b32.xlu0 %v333, 64
  %v470 = vpop.permute.xlu0 %469
  %471 = vrot.lane.b32.xlu0 %v336, 64
  %v472 = vpop.permute.xlu0 %471
  %473 = vrot.lane.b32.xlu0 %v338, 64
  %v474 = vpop.permute.xlu0 %473
  %475 = vrot.lane.b32.xlu0 %v341, 64
  %v476 = vpop.permute.xlu0 %475
  %477 = vrot.lane.b32.xlu0 %v343, 64
  %v478 = vpop.permute.xlu0 %477
  %479 = vrot.lane.b32.xlu0 %v346, 64
  %v480 = vpop.permute.xlu0 %479
  %481 = vrot.lane.b32.xlu0 %v348, 64
  %v482 = vpop.permute.xlu0 %481
  %483 = vrot.lane.b32.xlu0 %v351, 64
  %v484 = vpop.permute.xlu0 %483
  %485 = vrot.lane.b32.xlu0 %v353, 64
  %v486 = vpop.permute.xlu0 %485
  %487 = vrot.lane.b32.xlu0 %v356, 64
  %v488 = vpop.permute.xlu0 %487
  %489 = vrot.lane.b32.xlu0 %v358, 64
  %v490 = vpop.permute.xlu0 %489
  %491 = vrot.lane.b32.xlu0 %v361, 64
  %v492 = vpop.permute.xlu0 %491
  %493 = vrot.lane.b32.xlu0 %v363, 64
  %v494 = vpop.permute.xlu0 %493
  %495 = vrot.lane.b32.xlu0 %v366, 64
  %v496 = vpop.permute.xlu0 %495
  %497 = vrot.lane.b32.xlu0 %v368, 64
  %v498 = vpop.permute.xlu0 %497
  %499 = vrot.lane.b32.xlu0 %v371, 64
  %v500 = vpop.permute.xlu0 %499
  %501 = vrot.lane.b32.xlu0 %v373, 64
  %v502 = vpop.permute.xlu0 %501
  %503 = vrot.lane.b32.xlu0 %v376, 64
  %v504 = vpop.permute.xlu0 %503
  %505 = vrot.lane.b32.xlu0 %v378, 64
  %v506 = vpop.permute.xlu0 %505
  %vm571 = vcmask 1045504
  %v572 = vrot.slane %v14, 2
  %v573 = vrot.slane %v15, 2
  %v574 = vsel %vm571, %v572, %v573
  %v575 = vrot.slane %v16, 2
  %v576 = vsel %vm571, %v573, %v575
  %v577 = vrot.slane %v17, 2
  %v578 = vrot.slane %v18, 2
  %v579 = vsel %vm571, %v577, %v578
  %v580 = vrot.slane %v19, 2
  %v581 = vsel %vm571, %v578, %v580
  %v582 = vrot.slane %v20, 2
  %v583 = vrot.slane %v21, 2
  %v584 = vsel %vm571, %v582, %v583
  %v585 = vrot.slane %v22, 2
  %v586 = vsel %vm571, %v583, %v585
  %v587 = vrot.slane %v23, 2
  %v588 = vrot.slane %v24, 2
  %v589 = vsel %vm571, %v587, %v588
  %v590 = vrot.slane %v25, 2
  %v591 = vsel %vm571, %v588, %v590
  %v592 = vrot.slane %v26, 2
  %v593 = vrot.slane %v27, 2
  %v594 = vsel %vm571, %v592, %v593
  %v595 = vrot.slane %v28, 2
  %v596 = vsel %vm571, %v593, %v595
  %v597 = vrot.slane %v29, 2
  %v598 = vrot.slane %v30, 2
  %v599 = vsel %vm571, %v597, %v598
  %v600 = vrot.slane %v31, 2
  %v601 = vsel %vm571, %v598, %v600
  %v602 = vrot.slane %v32, 2
  %v603 = vrot.slane %v33, 2
  %v604 = vsel %vm571, %v602, %v603
  %v605 = vrot.slane %v34, 2
  %v606 = vsel %vm571, %v603, %v605
  %v607 = vrot.slane %v35, 2
  %v608 = vrot.slane %v36, 2
  %v609 = vsel %vm571, %v607, %v608
  %v610 = vrot.slane %v37, 2
  %v611 = vsel %vm571, %v608, %v610
  %v612 = vrot.slane %v38, 2
  %v613 = vrot.slane %v39, 2
  %v614 = vsel %vm571, %v612, %v613
  %v615 = vrot.slane %v40, 2
  %v616 = vsel %vm571, %v613, %v615
  %v617 = vrot.slane %v41, 2
  %v618 = vrot.slane %v42, 2
  %v619 = vsel %vm571, %v617, %v618
  %v620 = vrot.slane %v43, 2
  %v621 = vsel %vm571, %v618, %v620
  %v622 = vrot.slane %v44, 2
  %v623 = vrot.slane %v45, 2
  %v624 = vsel %vm571, %v622, %v623
  %v625 = vrot.slane %v46, 2
  %v626 = vsel %vm571, %v623, %v625
  %v627 = vrot.slane %v47, 2
  %v628 = vrot.slane %v48, 2
  %v629 = vsel %vm571, %v627, %v628
  %v630 = vrot.slane %v49, 2
  %v631 = vsel %vm571, %v628, %v630
  %v632 = vrot.slane %v50, 2
  %v633 = vrot.slane %v51, 2
  %v634 = vsel %vm571, %v632, %v633
  %v635 = vrot.slane %v52, 2
  %v636 = vsel %vm571, %v633, %v635
  %v637 = vrot.slane %v53, 2
  %v638 = vrot.slane %v54, 2
  %v639 = vsel %vm571, %v637, %v638
  %v640 = vrot.slane %v55, 2
  %v641 = vsel %vm571, %v638, %v640
  %v642 = vrot.slane %v56, 2
  %v643 = vrot.slane %v57, 2
  %v644 = vsel %vm571, %v642, %v643
  %v645 = vrot.slane %v58, 2
  %v646 = vsel %vm571, %v643, %v645
  %v647 = vrot.slane %v59, 2
  %v648 = vrot.slane %v60, 2
  %v649 = vsel %vm571, %v647, %v648
  %v650 = vrot.slane %v61, 2
  %v651 = vsel %vm571, %v648, %v650
  %v652 = vrot.slane %v68, 2
  %v653 = vrot.slane %v69, 2
  %v654 = vsel %vm571, %v652, %v653
  %v655 = vrot.slane %v70, 2
  %v656 = vsel %vm571, %v653, %v655
  %v657 = vrot.slane %v71, 2
  %v658 = vrot.slane %v72, 2
  %v659 = vsel %vm571, %v657, %v658
  %v660 = vrot.slane %v73, 2
  %v661 = vsel %vm571, %v658, %v660
  %v662 = vrot.slane %v74, 2
  %v663 = vrot.slane %v75, 2
  %v664 = vsel %vm571, %v662, %v663
  %v665 = vrot.slane %v76, 2
  %v666 = vsel %vm571, %v663, %v665
  %v667 = vrot.slane %v77, 2
  %v668 = vrot.slane %v78, 2
  %v669 = vsel %vm571, %v667, %v668
  %v670 = vrot.slane %v79, 2
  %v671 = vsel %vm571, %v668, %v670
  %v672 = vrot.slane %v80, 2
  %v673 = vrot.slane %v81, 2
  %v674 = vsel %vm571, %v672, %v673
  %v675 = vrot.slane %v82, 2
  %v676 = vsel %vm571, %v673, %v675
  %v677 = vrot.slane %v83, 2
  %v678 = vrot.slane %v84, 2
  %v679 = vsel %vm571, %v677, %v678
  %v680 = vrot.slane %v85, 2
  %v681 = vsel %vm571, %v678, %v680
  %v682 = vrot.slane %v86, 2
  %v683 = vrot.slane %v87, 2
  %v684 = vsel %vm571, %v682, %v683
  %v685 = vrot.slane %v88, 2
  %v686 = vsel %vm571, %v683, %v685
  %v687 = vrot.slane %v89, 2
  %v688 = vrot.slane %v90, 2
  %v689 = vsel %vm571, %v687, %v688
  %v690 = vrot.slane %v91, 2
  %v691 = vsel %vm571, %v688, %v690
  %v692 = vrot.slane %v92, 2
  %v693 = vrot.slane %v93, 2
  %v694 = vsel %vm571, %v692, %v693
  %v695 = vrot.slane %v94, 2
  %v696 = vsel %vm571, %v693, %v695
  %v697 = vrot.slane %v95, 2
  %v698 = vrot.slane %v96, 2
  %v699 = vsel %vm571, %v697, %v698
  %v700 = vrot.slane %v97, 2
  %v701 = vsel %vm571, %v698, %v700
  %v702 = vrot.slane %v98, 2
  %v703 = vrot.slane %v99, 2
  %v704 = vsel %vm571, %v702, %v703
  %v705 = vrot.slane %v100, 2
  %v706 = vsel %vm571, %v703, %v705
  %v707 = vrot.slane %v101, 2
  %v708 = vrot.slane %v102, 2
  %v709 = vsel %vm571, %v707, %v708
  %v710 = vrot.slane %v103, 2
  %v711 = vsel %vm571, %v708, %v710
  %v712 = vrot.slane %v104, 2
  %v713 = vrot.slane %v105, 2
  %v714 = vsel %vm571, %v712, %v713
  %v715 = vrot.slane %v106, 2
  %v716 = vsel %vm571, %v713, %v715
  %v717 = vrot.slane %v107, 2
  %v718 = vrot.slane %v108, 2
  %v719 = vsel %vm571, %v717, %v718
  %v720 = vrot.slane %v109, 2
  %v721 = vsel %vm571, %v718, %v720
  %v722 = vrot.slane %v110, 2
  %v723 = vrot.slane %v111, 2
  %v724 = vsel %vm571, %v722, %v723
  %v725 = vrot.slane %v112, 2
  %v726 = vsel %vm571, %v723, %v725
  %v727 = vrot.slane %v113, 2
  %v728 = vrot.slane %v114, 2
  %v729 = vsel %vm571, %v727, %v728
  %v730 = vrot.slane %v115, 2
  %v731 = vsel %vm571, %v728, %v730
  %800 = vrot.lane.b32.xlu0 %v17, 64
  %v801 = vpop.permute.xlu0 %800
  %802 = vrot.lane.b32.xlu0 %v18, 64
  %v803 = vpop.permute.xlu0 %802
  %804 = vrot.lane.b32.xlu0 %v20, 64
  %v805 = vpop.permute.xlu0 %804
  %806 = vrot.lane.b32.xlu0 %v21, 64
  %v807 = vpop.permute.xlu0 %806
  %808 = vrot.lane.b32.xlu0 %v23, 64
  %v809 = vpop.permute.xlu0 %808
  %810 = vrot.lane.b32.xlu0 %v24, 64
  %v811 = vpop.permute.xlu0 %810
  %812 = vrot.lane.b32.xlu0 %v26, 64
  %v813 = vpop.permute.xlu0 %812
  %814 = vrot.lane.b32.xlu0 %v27, 64
  %v815 = vpop.permute.xlu0 %814
  %816 = vrot.lane.b32.xlu0 %v29, 64
  %v817 = vpop.permute.xlu0 %816
  %818 = vrot.lane.b32.xlu0 %v30, 64
  %v819 = vpop.permute.xlu0 %818
  %820 = vrot.lane.b32.xlu0 %v32, 64
  %v821 = vpop.permute.xlu0 %820
  %822 = vrot.lane.b32.xlu0 %v33, 64
  %v823 = vpop.permute.xlu0 %822
  %824 = vrot.lane.b32.xlu0 %v35, 64
  %v825 = vpop.permute.xlu0 %824
  %826 = vrot.lane.b32.xlu0 %v36, 64
  %v827 = vpop.permute.xlu0 %826
  %828 = vrot.lane.b32.xlu0 %v38, 64
  %v829 = vpop.permute.xlu0 %828
  %830 = vrot.lane.b32.xlu0 %v39, 64
  %v831 = vpop.permute.xlu0 %830
  %832 = vrot.lane.b32.xlu0 %v41, 64
  %v833 = vpop.permute.xlu0 %832
  %834 = vrot.lane.b32.xlu0 %v42, 64
  %v835 = vpop.permute.xlu0 %834
  %836 = vrot.lane.b32.xlu0 %v44, 64
  %v837 = vpop.permute.xlu0 %836
  %838 = vrot.lane.b32.xlu0 %v45, 64
  %v839 = vpop.permute.xlu0 %838
  %840 = vrot.lane.b32.xlu0 %v47, 64
  %v841 = vpop.permute.xlu0 %840
  %842 = vrot.lane.b32.xlu0 %v48, 64
  %v843 = vpop.permute.xlu0 %842
  %844 = vrot.lane.b32.xlu0 %v50, 64
  %v845 = vpop.permute.xlu0 %844
  %846 = vrot.lane.b32.xlu0 %v51, 64
  %v847 = vpop.permute.xlu0 %846
  %848 = vrot.lane.b32.xlu0 %v53, 64
  %v849 = vpop.permute.xlu0 %848
  %850 = vrot.lane.b32.xlu0 %v54, 64
  %v851 = vpop.permute.xlu0 %850
  %852 = vrot.lane.b32.xlu0 %v56, 64
  %v853 = vpop.permute.xlu0 %852
  %854 = vrot.lane.b32.xlu0 %v57, 64
  %v855 = vpop.permute.xlu0 %854
  %856 = vrot.lane.b32.xlu0 %v59, 64
  %v857 = vpop.permute.xlu0 %856
  %858 = vrot.lane.b32.xlu0 %v60, 64
  %v859 = vpop.permute.xlu0 %858
  %860 = vrot.lane.b32.xlu0 %v62, 64
  %v861 = vpop.permute.xlu0 %860
  %862 = vrot.lane.b32.xlu0 %v63, 64
  %v863 = vpop.permute.xlu0 %862
  %864 = vrot.lane.b32.xlu0 %v71, 64
  %v865 = vpop.permute.xlu0 %864
  %866 = vrot.lane.b32.xlu0 %v72, 64
  %v867 = vpop.permute.xlu0 %866
  %868 = vrot.lane.b32.xlu0 %v74, 64
  %v869 = vpop.permute.xlu0 %868
  %870 = vrot.lane.b32.xlu0 %v75, 64
  %v871 = vpop.permute.xlu0 %870
  %872 = vrot.lane.b32.xlu0 %v77, 64
  %v873 = vpop.permute.xlu0 %872
  %874 = vrot.lane.b32.xlu0 %v78, 64
  %v875 = vpop.permute.xlu0 %874
  %876 = vrot.lane.b32.xlu0 %v80, 64
  %v877 = vpop.permute.xlu0 %876
  %878 = vrot.lane.b32.xlu0 %v81, 64
  %v879 = vpop.permute.xlu0 %878
  %880 = vrot.lane.b32.xlu0 %v83, 64
  %v881 = vpop.permute.xlu0 %880
  %882 = vrot.lane.b32.xlu0 %v84, 64
  %v883 = vpop.permute.xlu0 %882
  %884 = vrot.lane.b32.xlu0 %v86, 64
  %v885 = vpop.permute.xlu0 %884
  %886 = vrot.lane.b32.xlu0 %v87, 64
  %v887 = vpop.permute.xlu0 %886
  %888 = vrot.lane.b32.xlu0 %v89, 64
  %v889 = vpop.permute.xlu0 %888
  %890 = vrot.lane.b32.xlu0 %v90, 64
  %v891 = vpop.permute.xlu0 %890
  %892 = vrot.lane.b32.xlu0 %v92, 64
  %v893 = vpop.permute.xlu0 %892
  %894 = vrot.lane.b32.xlu0 %v93, 64
  %v895 = vpop.permute.xlu0 %894
  %896 = vrot.lane.b32.xlu0 %v95, 64
  %v897 = vpop.permute.xlu0 %896
  %898 = vrot.lane.b32.xlu0 %v96, 64
  %v899 = vpop.permute.xlu0 %898
  %900 = vrot.lane.b32.xlu0 %v98, 64
  %v901 = vpop.permute.xlu0 %900
  %902 = vrot.lane.b32.xlu0 %v99, 64
  %v903 = vpop.permute.xlu0 %902
  %904 = vrot.lane.b32.xlu0 %v101, 64
  %v905 = vpop.permute.xlu0 %904
  %906 = vrot.lane.b32.xlu0 %v102, 64
  %v907 = vpop.permute.xlu0 %906
  %908 = vrot.lane.b32.xlu0 %v104, 64
  %v909 = vpop.permute.xlu0 %908
  %910 = vrot.lane.b32.xlu0 %v105, 64
  %v911 = vpop.permute.xlu0 %910
  %912 = vrot.lane.b32.xlu0 %v107, 64
  %v913 = vpop.permute.xlu0 %912
  %914 = vrot.lane.b32.xlu0 %v108, 64
  %v915 = vpop.permute.xlu0 %914
  %916 = vrot.lane.b32.xlu0 %v110, 64
  %v917 = vpop.permute.xlu0 %916
  %918 = vrot.lane.b32.xlu0 %v111, 64
  %v919 = vpop.permute.xlu0 %918
  %920 = vrot.lane.b32.xlu0 %v113, 64
  %v921 = vpop.permute.xlu0 %920
  %922 = vrot.lane.b32.xlu0 %v114, 64
  %v923 = vpop.permute.xlu0 %922
  %924 = vrot.lane.b32.xlu0 %v116, 64
  %v925 = vpop.permute.xlu0 %924
  %926 = vrot.lane.b32.xlu0 %v117, 64
  %v927 = vpop.permute.xlu0 %926
  %v994 = vrot.slane %v62, 1
  %v995 = vrot.slane %v63, 1
  %v996 = vsel %vm218, %v994, %v995
  %v997 = vrot.slane %v64, 1
  %v998 = vsel %vm218, %v995, %v997
  %v999 = vrot.slane %v116, 1
  %v1000 = vrot.slane %v117, 1
  %v1001 = vsel %vm218, %v999, %v1000
  %v1002 = vrot.slane %v118, 1
  %v1003 = vsel %vm218, %v1000, %v1002
  %v1068 = vrot.slane %v62, 2
  %v1069 = vrot.slane %v63, 2
  %v1070 = vsel %vm571, %v1068, %v1069
  %v1071 = vrot.slane %v64, 2
  %v1072 = vsel %vm571, %v1069, %v1071
  %v1073 = vrot.slane %v116, 2
  %v1074 = vrot.slane %v117, 2
  %v1075 = vsel %vm571, %v1073, %v1074
  %v1076 = vrot.slane %v118, 2
  %v1077 = vsel %vm571, %v1074, %v1076
  %1078 = vrot.lane.b32.xlu0 %v579, 64
  %v1079 = vpop.permute.xlu0 %1078
  %1080 = vrot.lane.b32.xlu0 %v581, 64
  %v1081 = vpop.permute.xlu0 %1080
  %1082 = vrot.lane.b32.xlu0 %v584, 64
  %v1083 = vpop.permute.xlu0 %1082
  %1084 = vrot.lane.b32.xlu0 %v586, 64
  %v1085 = vpop.permute.xlu0 %1084
  %1086 = vrot.lane.b32.xlu0 %v589, 64
  %v1087 = vpop.permute.xlu0 %1086
  %1088 = vrot.lane.b32.xlu0 %v591, 64
  %v1089 = vpop.permute.xlu0 %1088
  %1090 = vrot.lane.b32.xlu0 %v594, 64
  %v1091 = vpop.permute.xlu0 %1090
  %1092 = vrot.lane.b32.xlu0 %v596, 64
  %v1093 = vpop.permute.xlu0 %1092
  %1094 = vrot.lane.b32.xlu0 %v599, 64
  %v1095 = vpop.permute.xlu0 %1094
  %1096 = vrot.lane.b32.xlu0 %v601, 64
  %v1097 = vpop.permute.xlu0 %1096
  %1098 = vrot.lane.b32.xlu0 %v604, 64
  %v1099 = vpop.permute.xlu0 %1098
  %1100 = vrot.lane.b32.xlu0 %v606, 64
  %v1101 = vpop.permute.xlu0 %1100
  %1102 = vrot.lane.b32.xlu0 %v609, 64
  %v1103 = vpop.permute.xlu0 %1102
  %1104 = vrot.lane.b32.xlu0 %v611, 64
  %v1105 = vpop.permute.xlu0 %1104
  %1106 = vrot.lane.b32.xlu0 %v614, 64
  %v1107 = vpop.permute.xlu0 %1106
  %1108 = vrot.lane.b32.xlu0 %v616, 64
  %v1109 = vpop.permute.xlu0 %1108
  %1110 = vrot.lane.b32.xlu0 %v619, 64
  %v1111 = vpop.permute.xlu0 %1110
  %1112 = vrot.lane.b32.xlu0 %v621, 64
  %v1113 = vpop.permute.xlu0 %1112
  %1114 = vrot.lane.b32.xlu0 %v624, 64
  %v1115 = vpop.permute.xlu0 %1114
  %1116 = vrot.lane.b32.xlu0 %v626, 64
  %v1117 = vpop.permute.xlu0 %1116
  %1118 = vrot.lane.b32.xlu0 %v629, 64
  %v1119 = vpop.permute.xlu0 %1118
  %1120 = vrot.lane.b32.xlu0 %v631, 64
  %v1121 = vpop.permute.xlu0 %1120
  %1122 = vrot.lane.b32.xlu0 %v634, 64
  %v1123 = vpop.permute.xlu0 %1122
  %1124 = vrot.lane.b32.xlu0 %v636, 64
  %v1125 = vpop.permute.xlu0 %1124
  %1126 = vrot.lane.b32.xlu0 %v639, 64
  %v1127 = vpop.permute.xlu0 %1126
  %1128 = vrot.lane.b32.xlu0 %v641, 64
  %v1129 = vpop.permute.xlu0 %1128
  %1130 = vrot.lane.b32.xlu0 %v644, 64
  %v1131 = vpop.permute.xlu0 %1130
  %1132 = vrot.lane.b32.xlu0 %v646, 64
  %v1133 = vpop.permute.xlu0 %1132
  %1134 = vrot.lane.b32.xlu0 %v649, 64
  %v1135 = vpop.permute.xlu0 %1134
  %1136 = vrot.lane.b32.xlu0 %v651, 64
  %v1137 = vpop.permute.xlu0 %1136
  %1138 = vrot.lane.b32.xlu0 %v1070, 64
  %v1139 = vpop.permute.xlu0 %1138
  %1140 = vrot.lane.b32.xlu0 %v1072, 64
  %v1141 = vpop.permute.xlu0 %1140
  %1142 = vrot.lane.b32.xlu0 %v659, 64
  %v1143 = vpop.permute.xlu0 %1142
  %1144 = vrot.lane.b32.xlu0 %v661, 64
  %v1145 = vpop.permute.xlu0 %1144
  %1146 = vrot.lane.b32.xlu0 %v664, 64
  %v1147 = vpop.permute.xlu0 %1146
  %1148 = vrot.lane.b32.xlu0 %v666, 64
  %v1149 = vpop.permute.xlu0 %1148
  %1150 = vrot.lane.b32.xlu0 %v669, 64
  %v1151 = vpop.permute.xlu0 %1150
  %1152 = vrot.lane.b32.xlu0 %v671, 64
  %v1153 = vpop.permute.xlu0 %1152
  %1154 = vrot.lane.b32.xlu0 %v674, 64
  %v1155 = vpop.permute.xlu0 %1154
  %1156 = vrot.lane.b32.xlu0 %v676, 64
  %v1157 = vpop.permute.xlu0 %1156
  %1158 = vrot.lane.b32.xlu0 %v679, 64
  %v1159 = vpop.permute.xlu0 %1158
  %1160 = vrot.lane.b32.xlu0 %v681, 64
  %v1161 = vpop.permute.xlu0 %1160
  %1162 = vrot.lane.b32.xlu0 %v684, 64
  %v1163 = vpop.permute.xlu0 %1162
  %1164 = vrot.lane.b32.xlu0 %v686, 64
  %v1165 = vpop.permute.xlu0 %1164
  %1166 = vrot.lane.b32.xlu0 %v689, 64
  %v1167 = vpop.permute.xlu0 %1166
  %1168 = vrot.lane.b32.xlu0 %v691, 64
  %v1169 = vpop.permute.xlu0 %1168
  %1170 = vrot.lane.b32.xlu0 %v694, 64
  %v1171 = vpop.permute.xlu0 %1170
  %1172 = vrot.lane.b32.xlu0 %v696, 64
  %v1173 = vpop.permute.xlu0 %1172
  %1174 = vrot.lane.b32.xlu0 %v699, 64
  %v1175 = vpop.permute.xlu0 %1174
  %1176 = vrot.lane.b32.xlu0 %v701, 64
  %v1177 = vpop.permute.xlu0 %1176
  %1178 = vrot.lane.b32.xlu0 %v704, 64
  %v1179 = vpop.permute.xlu0 %1178
  %1180 = vrot.lane.b32.xlu0 %v706, 64
  %v1181 = vpop.permute.xlu0 %1180
  %1182 = vrot.lane.b32.xlu0 %v709, 64
  %v1183 = vpop.permute.xlu0 %1182
  %1184 = vrot.lane.b32.xlu0 %v711, 64
  %v1185 = vpop.permute.xlu0 %1184
  %1186 = vrot.lane.b32.xlu0 %v714, 64
  %v1187 = vpop.permute.xlu0 %1186
  %1188 = vrot.lane.b32.xlu0 %v716, 64
  %v1189 = vpop.permute.xlu0 %1188
  %1190 = vrot.lane.b32.xlu0 %v719, 64
  %v1191 = vpop.permute.xlu0 %1190
  %1192 = vrot.lane.b32.xlu0 %v721, 64
  %v1193 = vpop.permute.xlu0 %1192
  %1194 = vrot.lane.b32.xlu0 %v724, 64
  %v1195 = vpop.permute.xlu0 %1194
  %1196 = vrot.lane.b32.xlu0 %v726, 64
  %v1197 = vpop.permute.xlu0 %1196
  %1198 = vrot.lane.b32.xlu0 %v729, 64
  %v1199 = vpop.permute.xlu0 %1198
  %1200 = vrot.lane.b32.xlu0 %v731, 64
  %v1201 = vpop.permute.xlu0 %1200
  %1202 = vrot.lane.b32.xlu0 %v1075, 64
  %v1203 = vpop.permute.xlu0 %1202
  %1204 = vrot.lane.b32.xlu0 %v1077, 64
  %v1205 = vpop.permute.xlu0 %1204
  %v1276 = vrot.slane %v65, 1
  %v1277 = vrot.slane %v66, 1
  %v1278 = vsel %vm218, %v1276, %v1277
  %v1279 = vrot.slane %v67, 1
  %v1280 = vsel %vm218, %v1277, %v1279
  %v1281 = vrot.slane %v119, 1
  %v1282 = vrot.slane %v120, 1
  %v1283 = vsel %vm218, %v1281, %v1282
  %v1284 = vrot.slane %v121, 1
  %v1285 = vsel %vm218, %v1282, %v1284
  %1286 = vrot.lane.b32.xlu0 %v996, 64
  %v1287 = vpop.permute.xlu0 %1286
  %1288 = vrot.lane.b32.xlu0 %v998, 64
  %v1289 = vpop.permute.xlu0 %1288
  %1290 = vrot.lane.b32.xlu0 %v1278, 64
  %v1291 = vpop.permute.xlu0 %1290
  %1292 = vrot.lane.b32.xlu0 %v1280, 64
  %v1293 = vpop.permute.xlu0 %1292
  %1294 = vrot.lane.b32.xlu0 %v1001, 64
  %v1295 = vpop.permute.xlu0 %1294
  %1296 = vrot.lane.b32.xlu0 %v1003, 64
  %v1297 = vpop.permute.xlu0 %1296
  %1298 = vrot.lane.b32.xlu0 %v1283, 64
  %v1299 = vpop.permute.xlu0 %1298
  %1300 = vrot.lane.b32.xlu0 %v1285, 64
  %v1301 = vpop.permute.xlu0 %1300
  %v1310 = vrot.slane %v65, 2
  %v1311 = vrot.slane %v66, 2
  %v1312 = vsel %vm571, %v1310, %v1311
  %v1313 = vrot.slane %v67, 2
  %v1314 = vsel %vm571, %v1311, %v1313
  %v1315 = vrot.slane %v119, 2
  %v1316 = vrot.slane %v120, 2
  %v1317 = vsel %vm571, %v1315, %v1316
  %v1318 = vrot.slane %v121, 2
  %v1319 = vsel %vm571, %v1316, %v1318
  %vm1328 = vcmask 523264
  %v1329 = vsel %vm1328, %v14, %v380
  %v1330 = vsel %vm1328, %v15, %v382
  %v1331 = vsel %vm1328, %v17, %v384
  %v1332 = vsel %vm1328, %v18, %v386
  %v1333 = vsel %vm1328, %v20, %v388
  %v1334 = vsel %vm1328, %v21, %v390
  %v1335 = vsel %vm1328, %v23, %v392
  %v1336 = vsel %vm1328, %v24, %v394
  %v1337 = vsel %vm1328, %v26, %v396
  %v1338 = vsel %vm1328, %v27, %v398
  %v1339 = vsel %vm1328, %v29, %v400
  %v1340 = vsel %vm1328, %v30, %v402
  %v1341 = vsel %vm1328, %v32, %v404
  %v1342 = vsel %vm1328, %v33, %v406
  %v1343 = vsel %vm1328, %v35, %v408
  %v1344 = vsel %vm1328, %v36, %v410
  %v1345 = vsel %vm1328, %v38, %v412
  %v1346 = vsel %vm1328, %v39, %v414
  %v1347 = vsel %vm1328, %v41, %v416
  %v1348 = vsel %vm1328, %v42, %v418
  %v1349 = vsel %vm1328, %v44, %v420
  %v1350 = vsel %vm1328, %v45, %v422
  %v1351 = vsel %vm1328, %v47, %v424
  %v1352 = vsel %vm1328, %v48, %v426
  %v1353 = vsel %vm1328, %v50, %v428
  %v1354 = vsel %vm1328, %v51, %v430
  %v1355 = vsel %vm1328, %v53, %v432
  %v1356 = vsel %vm1328, %v54, %v434
  %v1357 = vsel %vm1328, %v56, %v436
  %v1358 = vsel %vm1328, %v57, %v438
  %v1359 = vsel %vm1328, %v59, %v440
  %v1360 = vsel %vm1328, %v60, %v442
  %v1361 = vsel %vm1328, %v68, %v444
  %v1362 = vsel %vm1328, %v69, %v446
  %v1363 = vsel %vm1328, %v71, %v448
  %v1364 = vsel %vm1328, %v72, %v450
  %v1365 = vsel %vm1328, %v74, %v452
  %v1366 = vsel %vm1328, %v75, %v454
  %v1367 = vsel %vm1328, %v77, %v456
  %v1368 = vsel %vm1328, %v78, %v458
  %v1369 = vsel %vm1328, %v80, %v460
  %v1370 = vsel %vm1328, %v81, %v462
  %v1371 = vsel %vm1328, %v83, %v464
  %v1372 = vsel %vm1328, %v84, %v466
  %v1373 = vsel %vm1328, %v86, %v468
  %v1374 = vsel %vm1328, %v87, %v470
  %v1375 = vsel %vm1328, %v89, %v472
  %v1376 = vsel %vm1328, %v90, %v474
  %v1377 = vsel %vm1328, %v92, %v476
  %v1378 = vsel %vm1328, %v93, %v478
  %v1379 = vsel %vm1328, %v95, %v480
  %v1380 = vsel %vm1328, %v96, %v482
  %v1381 = vsel %vm1328, %v98, %v484
  %v1382 = vsel %vm1328, %v99, %v486
  %v1383 = vsel %vm1328, %v101, %v488
  %v1384 = vsel %vm1328, %v102, %v490
  %v1385 = vsel %vm1328, %v104, %v492
  %v1386 = vsel %vm1328, %v105, %v494
  %v1387 = vsel %vm1328, %v107, %v496
  %v1388 = vsel %vm1328, %v108, %v498
  %v1389 = vsel %vm1328, %v110, %v500
  %v1390 = vsel %vm1328, %v111, %v502
  %v1391 = vsel %vm1328, %v113, %v504
  %v1392 = vsel %vm1328, %v114, %v506
  %v1393 = vsel %vm1328, %v574, %v801
  %v1394 = vsel %vm1328, %v576, %v803
  %v1395 = vsel %vm1328, %v579, %v805
  %v1396 = vsel %vm1328, %v581, %v807
  %v1397 = vsel %vm1328, %v584, %v809
  %v1398 = vsel %vm1328, %v586, %v811
  %v1399 = vsel %vm1328, %v589, %v813
  %v1400 = vsel %vm1328, %v591, %v815
  %v1401 = vsel %vm1328, %v594, %v817
  %v1402 = vsel %vm1328, %v596, %v819
  %v1403 = vsel %vm1328, %v599, %v821
  %v1404 = vsel %vm1328, %v601, %v823
  %v1405 = vsel %vm1328, %v604, %v825
  %v1406 = vsel %vm1328, %v606, %v827
  %v1407 = vsel %vm1328, %v609, %v829
  %v1408 = vsel %vm1328, %v611, %v831
  %v1409 = vsel %vm1328, %v614, %v833
  %v1410 = vsel %vm1328, %v616, %v835
  %v1411 = vsel %vm1328, %v619, %v837
  %v1412 = vsel %vm1328, %v621, %v839
  %v1413 = vsel %vm1328, %v624, %v841
  %v1414 = vsel %vm1328, %v626, %v843
  %v1415 = vsel %vm1328, %v629, %v845
  %v1416 = vsel %vm1328, %v631, %v847
  %v1417 = vsel %vm1328, %v634, %v849
  %v1418 = vsel %vm1328, %v636, %v851
  %v1419 = vsel %vm1328, %v639, %v853
  %v1420 = vsel %vm1328, %v641, %v855
  %v1421 = vsel %vm1328, %v644, %v857
  %v1422 = vsel %vm1328, %v646, %v859
  %v1423 = vsel %vm1328, %v649, %v861
  %v1424 = vsel %vm1328, %v651, %v863
  %v1425 = vsel %vm1328, %v654, %v865
  %v1426 = vsel %vm1328, %v656, %v867
  %v1427 = vsel %vm1328, %v659, %v869
  %v1428 = vsel %vm1328, %v661, %v871
  %v1429 = vsel %vm1328, %v664, %v873
  %v1430 = vsel %vm1328, %v666, %v875
  %v1431 = vsel %vm1328, %v669, %v877
  %v1432 = vsel %vm1328, %v671, %v879
  %v1433 = vsel %vm1328, %v674, %v881
  %v1434 = vsel %vm1328, %v676, %v883
  %v1435 = vsel %vm1328, %v679, %v885
  %v1436 = vsel %vm1328, %v681, %v887
  %v1437 = vsel %vm1328, %v684, %v889
  %v1438 = vsel %vm1328, %v686, %v891
  %v1439 = vsel %vm1328, %v689, %v893
  %v1440 = vsel %vm1328, %v691, %v895
  %v1441 = vsel %vm1328, %v694, %v897
  %v1442 = vsel %vm1328, %v696, %v899
  %v1443 = vsel %vm1328, %v699, %v901
  %v1444 = vsel %vm1328, %v701, %v903
  %v1445 = vsel %vm1328, %v704, %v905
  %v1446 = vsel %vm1328, %v706, %v907
  %v1447 = vsel %vm1328, %v709, %v909
  %v1448 = vsel %vm1328, %v711, %v911
  %v1449 = vsel %vm1328, %v714, %v913
  %v1450 = vsel %vm1328, %v716, %v915
  %v1451 = vsel %vm1328, %v719, %v917
  %v1452 = vsel %vm1328, %v721, %v919
  %v1453 = vsel %vm1328, %v724, %v921
  %v1454 = vsel %vm1328, %v726, %v923
  %v1455 = vsel %vm1328, %v729, %v925
  %v1456 = vsel %vm1328, %v731, %v927
  %v1457 = vsel %vm1328, %v226, %v1079
  %v1458 = vsel %vm1328, %v228, %v1081
  %v1459 = vsel %vm1328, %v231, %v1083
  %v1460 = vsel %vm1328, %v233, %v1085
  %v1461 = vsel %vm1328, %v236, %v1087
  %v1462 = vsel %vm1328, %v238, %v1089
  %v1463 = vsel %vm1328, %v241, %v1091
  %v1464 = vsel %vm1328, %v243, %v1093
  %v1465 = vsel %vm1328, %v246, %v1095
  %v1466 = vsel %vm1328, %v248, %v1097
  %v1467 = vsel %vm1328, %v251, %v1099
  %v1468 = vsel %vm1328, %v253, %v1101
  %v1469 = vsel %vm1328, %v256, %v1103
  %v1470 = vsel %vm1328, %v258, %v1105
  %v1471 = vsel %vm1328, %v261, %v1107
  %v1472 = vsel %vm1328, %v263, %v1109
  %v1473 = vsel %vm1328, %v266, %v1111
  %v1474 = vsel %vm1328, %v268, %v1113
  %v1475 = vsel %vm1328, %v271, %v1115
  %v1476 = vsel %vm1328, %v273, %v1117
  %v1477 = vsel %vm1328, %v276, %v1119
  %v1478 = vsel %vm1328, %v278, %v1121
  %v1479 = vsel %vm1328, %v281, %v1123
  %v1480 = vsel %vm1328, %v283, %v1125
  %v1481 = vsel %vm1328, %v286, %v1127
  %v1482 = vsel %vm1328, %v288, %v1129
  %v1483 = vsel %vm1328, %v291, %v1131
  %v1484 = vsel %vm1328, %v293, %v1133
  %v1485 = vsel %vm1328, %v296, %v1135
  %v1486 = vsel %vm1328, %v298, %v1137
  %v1487 = vsel %vm1328, %v996, %v1139
  %v1488 = vsel %vm1328, %v998, %v1141
  %v1489 = vsel %vm1328, %v306, %v1143
  %v1490 = vsel %vm1328, %v308, %v1145
  %v1491 = vsel %vm1328, %v311, %v1147
  %v1492 = vsel %vm1328, %v313, %v1149
  %v1493 = vsel %vm1328, %v316, %v1151
  %v1494 = vsel %vm1328, %v318, %v1153
  %v1495 = vsel %vm1328, %v321, %v1155
  %v1496 = vsel %vm1328, %v323, %v1157
  %v1497 = vsel %vm1328, %v326, %v1159
  %v1498 = vsel %vm1328, %v328, %v1161
  %v1499 = vsel %vm1328, %v331, %v1163
  %v1500 = vsel %vm1328, %v333, %v1165
  %v1501 = vsel %vm1328, %v336, %v1167
  %v1502 = vsel %vm1328, %v338, %v1169
  %v1503 = vsel %vm1328, %v341, %v1171
  %v1504 = vsel %vm1328, %v343, %v1173
  %v1505 = vsel %vm1328, %v346, %v1175
  %v1506 = vsel %vm1328, %v348, %v1177
  %v1507 = vsel %vm1328, %v351, %v1179
  %v1508 = vsel %vm1328, %v353, %v1181
  %v1509 = vsel %vm1328, %v356, %v1183
  %v1510 = vsel %vm1328, %v358, %v1185
  %v1511 = vsel %vm1328, %v361, %v1187
  %v1512 = vsel %vm1328, %v363, %v1189
  %v1513 = vsel %vm1328, %v366, %v1191
  %v1514 = vsel %vm1328, %v368, %v1193
  %v1515 = vsel %vm1328, %v371, %v1195
  %v1516 = vsel %vm1328, %v373, %v1197
  %v1517 = vsel %vm1328, %v376, %v1199
  %v1518 = vsel %vm1328, %v378, %v1201
  %v1519 = vsel %vm1328, %v1001, %v1203
  %v1520 = vsel %vm1328, %v1003, %v1205
  %v1521 = vsel %vm1328, %v62, %v1287
  %v1522 = vsel %vm1328, %v63, %v1289
  %v1523 = vsel %vm1328, %v65, %v1291
  %v1524 = vsel %vm1328, %v66, %v1293
  %v1525 = vsel %vm1328, %v116, %v1295
  %v1526 = vsel %vm1328, %v117, %v1297
  %v1527 = vsel %vm1328, %v119, %v1299
  %v1528 = vsel %vm1328, %v120, %v1301
  %v1529 = vsel %vm1328, %v584, 0.0
  %v1530 = vsel %vm1328, %v586, 0.0
  %v1531 = vsel %vm1328, %v589, 0.0
  %v1532 = vsel %vm1328, %v591, 0.0
  %v1533 = vsel %vm1328, %v594, 0.0
  %v1534 = vsel %vm1328, %v596, 0.0
  %v1535 = vsel %vm1328, %v599, 0.0
  %v1536 = vsel %vm1328, %v601, 0.0
  %v1537 = vsel %vm1328, %v604, 0.0
  %v1538 = vsel %vm1328, %v606, 0.0
  %v1539 = vsel %vm1328, %v609, 0.0
  %v1540 = vsel %vm1328, %v611, 0.0
  %v1541 = vsel %vm1328, %v614, 0.0
  %v1542 = vsel %vm1328, %v616, 0.0
  %v1543 = vsel %vm1328, %v619, 0.0
  %v1544 = vsel %vm1328, %v621, 0.0
  %v1545 = vsel %vm1328, %v624, 0.0
  %v1546 = vsel %vm1328, %v626, 0.0
  %v1547 = vsel %vm1328, %v629, 0.0
  %v1548 = vsel %vm1328, %v631, 0.0
  %v1549 = vsel %vm1328, %v634, 0.0
  %v1550 = vsel %vm1328, %v636, 0.0
  %v1551 = vsel %vm1328, %v639, 0.0
  %v1552 = vsel %vm1328, %v641, 0.0
  %v1553 = vsel %vm1328, %v644, 0.0
  %v1554 = vsel %vm1328, %v646, 0.0
  %v1555 = vsel %vm1328, %v649, 0.0
  %v1556 = vsel %vm1328, %v651, 0.0
  %v1557 = vsel %vm1328, %v1070, 0.0
  %v1558 = vsel %vm1328, %v1072, 0.0
  %v1559 = vsel %vm1328, %v1312, 0.0
  %v1560 = vsel %vm1328, %v1314, 0.0
  %v1561 = vsel %vm1328, %v664, 0.0
  %v1562 = vsel %vm1328, %v666, 0.0
  %v1563 = vsel %vm1328, %v669, 0.0
  %v1564 = vsel %vm1328, %v671, 0.0
  %v1565 = vsel %vm1328, %v674, 0.0
  %v1566 = vsel %vm1328, %v676, 0.0
  %v1567 = vsel %vm1328, %v679, 0.0
  %v1568 = vsel %vm1328, %v681, 0.0
  %v1569 = vsel %vm1328, %v684, 0.0
  %v1570 = vsel %vm1328, %v686, 0.0
  %v1571 = vsel %vm1328, %v689, 0.0
  %v1572 = vsel %vm1328, %v691, 0.0
  %v1573 = vsel %vm1328, %v694, 0.0
  %v1574 = vsel %vm1328, %v696, 0.0
  %v1575 = vsel %vm1328, %v699, 0.0
  %v1576 = vsel %vm1328, %v701, 0.0
  %v1577 = vsel %vm1328, %v704, 0.0
  %v1578 = vsel %vm1328, %v706, 0.0
  %v1579 = vsel %vm1328, %v709, 0.0
  %v1580 = vsel %vm1328, %v711, 0.0
  %v1581 = vsel %vm1328, %v714, 0.0
  %v1582 = vsel %vm1328, %v716, 0.0
  %v1583 = vsel %vm1328, %v719, 0.0
  %v1584 = vsel %vm1328, %v721, 0.0
  %v1585 = vsel %vm1328, %v724, 0.0
  %v1586 = vsel %vm1328, %v726, 0.0
  %v1587 = vsel %vm1328, %v729, 0.0
  %v1588 = vsel %vm1328, %v731, 0.0
  %v1589 = vsel %vm1328, %v1075, 0.0
  %v1590 = vsel %vm1328, %v1077, 0.0
  %v1591 = vsel %vm1328, %v1317, 0.0
  %v1592 = vsel %vm1328, %v1319, 0.0
  %v1593 = vld [vmem:[%s1] sm:$0xff]
  %v1594 = vld [vmem:[%s1 + $0x8] sm:$0xff]
  %v1595 = vld [vmem:[%s1 + $0x10] sm:$0xff]
  %v1596 = vld [vmem:[%s1 + $0x18] sm:$0xff]
  %v1597 = vld [vmem:[%s1 + $0x20] sm:$0xff]
  %v1598 = vld [vmem:[%s1 + $0x28] sm:$0xff]
  %v1599 = vld [vmem:[%s1 + $0x30] sm:$0xff]
  %v1600 = vld [vmem:[%s1 + $0x38] sm:$0xff]
  %v1601 = vld [vmem:[%s1 + $0x40] sm:$0xff]
  %v1602 = vld [vmem:[%s1 + $0x48] sm:$0xff]
  %v1603 = vld [vmem:[%s1 + $0x50] sm:$0xff]
  %v1604 = vld [vmem:[%s1 + $0x58] sm:$0xff]
  %v1605 = vld [vmem:[%s1 + $0x60] sm:$0xff]
  %v1606 = vld [vmem:[%s1 + $0x68] sm:$0xff]
  %v1607 = vld [vmem:[%s1 + $0x70] sm:$0xff]
  %v1608 = vld [vmem:[%s1 + $0x78] sm:$0xff]
  %v1609 = vld [vmem:[%s1 + $0x80] sm:$0xff]
  %v1610 = vld [vmem:[%s1 + $0x88] sm:$0xff]
  %v1611 = vld [vmem:[%s1 + $0x90] sm:$0xff]
  %v1612 = vld [vmem:[%s1 + $0x98] sm:$0xff]
  %v1613 = vld [vmem:[%s1 + $0xa0] sm:$0xff]
  %v1614 = vld [vmem:[%s1 + $0xa8] sm:$0xff]
  %v1615 = vld [vmem:[%s1 + $0xb0] sm:$0xff]
  %v1616 = vld [vmem:[%s1 + $0xb8] sm:$0xff]
  %v1617 = vld [vmem:[%s1 + $0xc0] sm:$0xff]
  %v1618 = vld [vmem:[%s1 + $0xc8] sm:$0xff]
  %v1619 = vld [vmem:[%s1 + $0xd0] sm:$0xff]
  %v1620 = vld [vmem:[%s1 + $0xd8] sm:$0xff]
  %v1621 = vld [vmem:[%s1 + $0xe0] sm:$0xff]
  %v1622 = vld [vmem:[%s1 + $0xe8] sm:$0xff]
  %v1623 = vld [vmem:[%s1 + $0xf0] sm:$0xff]
  %v1624 = vld [vmem:[%s1 + $0xf8] sm:$0xff]
  %v1625 = vld [vmem:[%s1 + $0x100] sm:$0xff]
  %v1626 = vld [vmem:[%s1 + $0x108] sm:$0xff]
  %v1627 = vld [vmem:[%s1 + $0x110] sm:$0xff]
  %v1628 = vld [vmem:[%s1 + $0x118] sm:$0xff]
  %v1629 = vld [vmem:[%s1 + $0x120] sm:$0xff]
  %v1630 = vld [vmem:[%s1 + $0x128] sm:$0xff]
  %v1631 = vld [vmem:[%s1 + $0x130] sm:$0xff]
  %v1632 = vld [vmem:[%s1 + $0x138] sm:$0xff]
  %v1633 = vld [vmem:[%s1 + $0x140] sm:$0xff]
  %v1634 = vld [vmem:[%s1 + $0x148] sm:$0xff]
  %v1635 = vld [vmem:[%s1 + $0x150] sm:$0xff]
  %v1636 = vld [vmem:[%s1 + $0x158] sm:$0xff]
  %v1637 = vld [vmem:[%s1 + $0x160] sm:$0xff]
  %v1638 = vld [vmem:[%s1 + $0x168] sm:$0xff]
  %v1639 = vld [vmem:[%s1 + $0x170] sm:$0xff]
  %v1640 = vld [vmem:[%s1 + $0x178] sm:$0xff]
  %v1641 = vld [vmem:[%s1 + $0x180] sm:$0xff]
  %v1642 = vld [vmem:[%s1 + $0x188] sm:$0xff]
  %v1643 = vld [vmem:[%s1 + $0x190] sm:$0xff]
  %v1644 = vld [vmem:[%s1 + $0x198] sm:$0xff]
  %v1645 = vld [vmem:[%s1 + $0x1a0] sm:$0xff]
  %v1646 = vld [vmem:[%s1 + $0x1a8] sm:$0xff]
  %v1647 = vld [vmem:[%s1 + $0x1b0] sm:$0xff]
  %v1648 = vld [vmem:[%s1 + $0x1b8] sm:$0xff]
  %v1649 = vld [vmem:[%s1 + $0x1c0] sm:$0xff]
  %v1650 = vld [vmem:[%s1 + $0x1c8] sm:$0xff]
  %v1651 = vld [vmem:[%s1 + $0x1d0] sm:$0xff]
  %v1652 = vld [vmem:[%s1 + $0x1d8] sm:$0xff]
  %v1653 = vld [vmem:[%s1 + $0x1e0] sm:$0xff]
  %v1654 = vld [vmem:[%s1 + $0x1e8] sm:$0xff]
  %v1655 = vld [vmem:[%s1 + $0x1f0] sm:$0xff]
  %v1656 = vld [vmem:[%s1 + $0x1f8] sm:$0xff]
  %v1657 = vld [vmem:[%s1 + $0x200] sm:$0xff]
  %v1658 = vld [vmem:[%s1 + $0x208] sm:$0xff]
  %v1659 = vld [vmem:[%s1 + $0x210] sm:$0xff]
  %v1660 = vld [vmem:[%s1 + $0x218] sm:$0xff]
  %v1661 = vld [vmem:[%s1 + $0x220] sm:$0xff]
  %v1662 = vld [vmem:[%s1 + $0x228] sm:$0xff]
  %v1663 = vld [vmem:[%s1 + $0x230] sm:$0xff]
  %v1664 = vld [vmem:[%s1 + $0x238] sm:$0xff]
  %v1665 = vld [vmem:[%s1 + $0x240] sm:$0xff]
  %v1666 = vld [vmem:[%s1 + $0x248] sm:$0xff]
  %v1667 = vld [vmem:[%s1 + $0x250] sm:$0xff]
  %v1668 = vld [vmem:[%s1 + $0x258] sm:$0xff]
  %v1669 = vld [vmem:[%s1 + $0x260] sm:$0xff]
  %v1670 = vld [vmem:[%s1 + $0x268] sm:$0xff]
  %v1671 = vld [vmem:[%s1 + $0x270] sm:$0xff]
  %v1672 = vld [vmem:[%s1 + $0x278] sm:$0xff]
  %v1673 = vld [vmem:[%s2] sm:$0x1]
  %v1675 = vlaneseq
  %v1676 = vshrl.u32 %v1675, 7
  %v1677 = vsub.s32 0, %v1676
  %v1678 = vrot.slane %v1673, %v1677
  %1680 = vmatprep.subr.mxu0 0.0
  %1681 = vmatpush1.msra.mxu0 %v1593
  %1682 = vmatprep.subr.mxu0 0.0
  %1683 = vmatpush1.msra.mxu0 %v1594
  %1684 = vmatprep.subr.mxu0 0.0
  %1685 = vmatpush1.msra.mxu0 %v1595
  %1686 = vmatprep.subr.mxu0 0.0
  %1687 = vmatpush1.msra.mxu0 %v1596
  %1688 = vmatprep.subr.mxu0 0.0
  %1689 = vmatpush1.msra.mxu0 %v1597
  %1690 = vmatprep.subr.mxu0 0.0
  %1691 = vmatpush1.msra.mxu0 %v1598
  %1692 = vmatprep.subr.mxu0 0.0
  %1693 = vmatpush1.msra.mxu0 %v1599
  %1694 = vmatprep.subr.mxu0 0.0
  %1695 = vmatpush1.msra.mxu0 %v1600
  %1696 = vmatprep.subr.mxu0 0.0
  %1697 = vmatpush1.msra.mxu0 %v1601
  %1698 = vmatprep.subr.mxu0 0.0
  %1699 = vmatpush1.msra.mxu0 %v1602
  %1700 = vmatprep.subr.mxu0 0.0
  %1701 = vmatpush1.msra.mxu0 %v1603
  %1702 = vmatprep.subr.mxu0 0.0
  %1703 = vmatpush1.msra.mxu0 %v1604
  %1704 = vmatprep.subr.mxu0 0.0
  %1705 = vmatpush1.msra.mxu0 %v1605
  %1706 = vmatprep.subr.mxu0 0.0
  %1707 = vmatpush1.msra.mxu0 %v1606
  %1708 = vmatprep.subr.mxu0 0.0
  %1709 = vmatpush1.msra.mxu0 %v1607
  %1710 = vmatprep.subr.mxu0 0.0
  %1711 = vmatpush1.msra.mxu0 %v1608
  %1712 = vmatprep.subr.mxu0 0.0
  %1713 = vmatpush1.msra.mxu0 %v1609
  %1714 = vmatprep.subr.mxu0 0.0
  %1715 = vmatpush1.msra.mxu0 %v1610
  %1716 = vmatprep.subr.mxu0 0.0
  %1717 = vmatpush1.msra.mxu0 %v1611
  %1718 = vmatprep.subr.mxu0 0.0
  %1719 = vmatpush1.msra.mxu0 %v1612
  %1720 = vmatprep.subr.mxu0 0.0
  %1721 = vmatpush1.msra.mxu0 %v1613
  %1722 = vmatprep.subr.mxu0 0.0
  %1723 = vmatpush1.msra.mxu0 %v1614
  %1724 = vmatprep.subr.mxu0 0.0
  %1725 = vmatpush1.msra.mxu0 %v1615
  %1726 = vmatprep.subr.mxu0 0.0
  %1727 = vmatpush1.msra.mxu0 %v1616
  %1728 = vmatprep.subr.mxu0 0.0
  %1729 = vmatpush1.msra.mxu0 %v1617
  %1730 = vmatprep.subr.mxu0 0.0
  %1731 = vmatpush1.msra.mxu0 %v1618
  %1732 = vmatprep.subr.mxu0 0.0
  %1733 = vmatpush1.msra.mxu0 %v1619
  %1734 = vmatprep.subr.mxu0 0.0
  %1735 = vmatpush1.msra.mxu0 %v1620
  %1736 = vmatprep.subr.mxu0 0.0
  %1737 = vmatpush1.msra.mxu0 %v1621
  %1738 = vmatprep.subr.mxu0 0.0
  %1739 = vmatpush1.msra.mxu0 %v1622
  %1740 = vmatprep.subr.mxu0 0.0
  %1741 = vmatpush1.msra.mxu0 %v1623
  %1742 = vmatprep.subr.mxu0 0.0
  %1743 = vmatpush1.msra.mxu0 %v1624
  %1744 = vmatprep.mubr.f32.mxu0 %v1393
  %1745 = vmatmul.mubr.f32.gmra.mrb[0].mxu0 %v1329
  %v1746 = vpop.f32.mrb[0].mxu0
  %v1747 = vadd.f32 %v1678, %v1746
  %v1748 = vpop.f32.mrb[0].mxu0
  %1749 = vmatprep.mubr.f32.mxu0 %v1394
  %1750 = vmatmul.mubr.f32.gmra.mrb[0].mxu0 %v1330
  %v1751 = vpop.f32.mrb[0].mxu0
  %v1752 = vadd.f32 %v1678, %v1751
  %v1753 = vpop.f32.mrb[0].mxu0
  %1754 = vmatprep.mubr.f32.mxu0 %v1395
  %1755 = vmatmul.mubr.f32.gmra.mrb[0].mxu0 %v1331
  %v1756 = vpop.f32.mrb[0].mxu0
  %v1757 = vadd.f32 %v1678, %v1756
  %v1758 = vpop.f32.mrb[0].mxu0
  %1759 = vmatprep.mubr.f32.mxu0 %v1396
  %1760 = vmatmul.mubr.f32.gmra.mrb[0].mxu0 %v1332
  %v1761 = vpop.f32.mrb[0].mxu0
  %v1762 = vadd.f32 %v1678, %v1761
  %v1763 = vpop.f32.mrb[0].mxu0
  %1764 = vmatprep.mubr.f32.mxu0 %v1397
  %1765 = vmatmul.mubr.f32.gmra.mrb[0].mxu0 %v1333
  %v1766 = vpop.f32.mrb[0].mxu0
  %v1767 = vadd.f32 %v1678, %v1766
  %v1768 = vpop.f32.mrb[0].mxu0
  %1769 = vmatprep.mubr.f32.mxu0 %v1398
  %1770 = vmatmul.mubr.f32.gmra.mrb[0].mxu0 %v1334
  %v1771 = vpop.f32.mrb[0].mxu0
  %v1772 = vadd.f32 %v1678, %v1771
  %v1773 = vpop.f32.mrb[0].mxu0
  %1774 = vmatprep.mubr.f32.mxu0 %v1399
  %1775 = vmatmul.mubr.f32.gmra.mrb[0].mxu0 %v1335
  %v1776 = vpop.f32.mrb[0].mxu0
  %v1777 = vadd.f32 %v1678, %v1776
  %v1778 = vpop.f32.mrb[0].mxu0
  %1779 = vmatprep.mubr.f32.mxu0 %v1400
  %1780 = vmatmul.mubr.f32.gmra.mrb[0].mxu0 %v1336
  %v1781 = vpop.f32.mrb[0].mxu0
  %v1782 = vadd.f32 %v1678, %v1781
  %v1783 = vpop.f32.mrb[0].mxu0
  %1784 = vmatprep.mubr.f32.mxu0 %v1401
  %1785 = vmatmul.mubr.f32.gmra.mrb[0].mxu0 %v1337
  %v1786 = vpop.f32.mrb[0].mxu0
  %v1787 = vadd.f32 %v1678, %v1786
  %v1788 = vpop.f32.mrb[0].mxu0
  %1789 = vmatprep.mubr.f32.mxu0 %v1402
  %1790 = vmatmul.mubr.f32.gmra.mrb[0].mxu0 %v1338
  %v1791 = vpop.f32.mrb[0].mxu0
  %v1792 = vadd.f32 %v1678, %v1791
  %v1793 = vpop.f32.mrb[0].mxu0
  %1794 = vmatprep.mubr.f32.mxu0 %v1403
  %1795 = vmatmul.mubr.f32.gmra.mrb[0].mxu0 %v1339
  %v1796 = vpop.f32.mrb[0].mxu0
  %v1797 = vadd.f32 %v1678, %v1796
  %v1798 = vpop.f32.mrb[0].mxu0
  %1799 = vmatprep.mubr.f32.mxu0 %v1404
  %1800 = vmatmul.mubr.f32.gmra.mrb[0].mxu0 %v1340
  %v1801 = vpop.f32.mrb[0].mxu0
  %v1802 = vadd.f32 %v1678, %v1801
  %v1803 = vpop.f32.mrb[0].mxu0
  %1804 = vmatprep.mubr.f32.mxu0 %v1405
  %1805 = vmatmul.mubr.f32.gmra.mrb[0].mxu0 %v1341
  %v1806 = vpop.f32.mrb[0].mxu0
  %v1807 = vadd.f32 %v1678, %v1806
  %v1808 = vpop.f32.mrb[0].mxu0
  %1809 = vmatprep.mubr.f32.mxu0 %v1406
  %1810 = vmatmul.mubr.f32.gmra.mrb[0].mxu0 %v1342
  %v1811 = vpop.f32.mrb[0].mxu0
  %v1812 = vadd.f32 %v1678, %v1811
  %v1813 = vpop.f32.mrb[0].mxu0
  %1814 = vmatprep.mubr.f32.mxu0 %v1407
  %1815 = vmatmul.mubr.f32.gmra.mrb[0].mxu0 %v1343
  %v1816 = vpop.f32.mrb[0].mxu0
  %v1817 = vadd.f32 %v1678, %v1816
  %v1818 = vpop.f32.mrb[0].mxu0
  %1819 = vmatprep.mubr.f32.mxu0 %v1408
  %1820 = vmatmul.mubr.f32.gmra.mrb[0].mxu0 %v1344
  %v1821 = vpop.f32.mrb[0].mxu0
  %v1822 = vadd.f32 %v1678, %v1821
  %v1823 = vpop.f32.mrb[0].mxu0
  %1824 = vmatprep.mubr.f32.mxu0 %v1409
  %1825 = vmatmul.mubr.f32.gmra.mrb[0].mxu0 %v1345
  %v1826 = vpop.f32.mrb[0].mxu0
  %v1827 = vadd.f32 %v1678, %v1826
  %v1828 = vpop.f32.mrb[0].mxu0
  %1829 = vmatprep.mubr.f32.mxu0 %v1410
  %1830 = vmatmul.mubr.f32.gmra.mrb[0].mxu0 %v1346
  %v1831 = vpop.f32.mrb[0].mxu0
  %v1832 = vadd.f32 %v1678, %v1831
  %v1833 = vpop.f32.mrb[0].mxu0
  %1834 = vmatprep.mubr.f32.mxu0 %v1411
  %1835 = vmatmul.mubr.f32.gmra.mrb[0].mxu0 %v1347
  %v1836 = vpop.f32.mrb[0].mxu0
  %v1837 = vadd.f32 %v1678, %v1836
  %v1838 = vpop.f32.mrb[0].mxu0
  %1839 = vmatprep.mubr.f32.mxu0 %v1412
  %1840 = vmatmul.mubr.f32.gmra.mrb[0].mxu0 %v1348
  %v1841 = vpop.f32.mrb[0].mxu0
  %v1842 = vadd.f32 %v1678, %v1841
  %v1843 = vpop.f32.mrb[0].mxu0
  %1844 = vmatprep.mubr.f32.mxu0 %v1413
  %1845 = vmatmul.mubr.f32.gmra.mrb[0].mxu0 %v1349
  %v1846 = vpop.f32.mrb[0].mxu0
  %v1847 = vadd.f32 %v1678, %v1846
  %v1848 = vpop.f32.mrb[0].mxu0
  %1849 = vmatprep.mubr.f32.mxu0 %v1414
  %1850 = vmatmul.mubr.f32.gmra.mrb[0].mxu0 %v1350
  %v1851 = vpop.f32.mrb[0].mxu0
  %v1852 = vadd.f32 %v1678, %v1851
  %v1853 = vpop.f32.mrb[0].mxu0
  %1854 = vmatprep.mubr.f32.mxu0 %v1415
  %1855 = vmatmul.mubr.f32.gmra.mrb[0].mxu0 %v1351
  %v1856 = vpop.f32.mrb[0].mxu0
  %v1857 = vadd.f32 %v1678, %v1856
  %v1858 = vpop.f32.mrb[0].mxu0
  %1859 = vmatprep.mubr.f32.mxu0 %v1416
  %1860 = vmatmul.mubr.f32.gmra.mrb[0].mxu0 %v1352
  %v1861 = vpop.f32.mrb[0].mxu0
  %v1862 = vadd.f32 %v1678, %v1861
  %v1863 = vpop.f32.mrb[0].mxu0
  %1864 = vmatprep.mubr.f32.mxu0 %v1417
  %1865 = vmatmul.mubr.f32.gmra.mrb[0].mxu0 %v1353
  %v1866 = vpop.f32.mrb[0].mxu0
  %v1867 = vadd.f32 %v1678, %v1866
  %v1868 = vpop.f32.mrb[0].mxu0
  %1869 = vmatprep.mubr.f32.mxu0 %v1418
  %1870 = vmatmul.mubr.f32.gmra.mrb[0].mxu0 %v1354
  %v1871 = vpop.f32.mrb[0].mxu0
  %v1872 = vadd.f32 %v1678, %v1871
  %v1873 = vpop.f32.mrb[0].mxu0
  %1874 = vmatprep.mubr.f32.mxu0 %v1419
  %1875 = vmatmul.mubr.f32.gmra.mrb[0].mxu0 %v1355
  %v1876 = vpop.f32.mrb[0].mxu0
  %v1877 = vadd.f32 %v1678, %v1876
  %v1878 = vpop.f32.mrb[0].mxu0
  %1879 = vmatprep.mubr.f32.mxu0 %v1420
  %1880 = vmatmul.mubr.f32.gmra.mrb[0].mxu0 %v1356
  %v1881 = vpop.f32.mrb[0].mxu0
  %v1882 = vadd.f32 %v1678, %v1881
  %v1883 = vpop.f32.mrb[0].mxu0
  %1884 = vmatprep.mubr.f32.mxu0 %v1421
  %1885 = vmatmul.mubr.f32.gmra.mrb[0].mxu0 %v1357
  %v1886 = vpop.f32.mrb[0].mxu0
  %v1887 = vpop.f32.mrb[0].mxu0
  %1888 = vmatprep.mubr.f32.mxu0 %v1422
  %1889 = vmatmul.mubr.f32.gmra.mrb[0].mxu0 %v1358
  %v1890 = vpop.f32.mrb[0].mxu0
  %v1891 = vpop.f32.mrb[0].mxu0
  %1892 = vmatprep.mubr.f32.mxu0 %v1423
  %1893 = vmatmul.mubr.f32.gmra.mrb[0].mxu0 %v1359
  %v1894 = vpop.f32.mrb[0].mxu0
  %v1895 = vpop.f32.mrb[0].mxu0
  %1896 = vmatprep.mubr.f32.mxu0 %v1424
  %1897 = vmatmul.mubr.f32.gmra.mrb[0].mxu0 %v1360
  %v1898 = vpop.f32.mrb[0].mxu0
  %v1899 = vpop.f32.mrb[0].mxu0
  %1900 = vmatprep.mubr.f32.mxu0 %v1425
  %1901 = vmatmul.mubr.f32.gmra.mrb[0].mxu0 %v1361
  %v1902 = vpop.f32.mrb[0].mxu0
  %v1903 = vadd.f32 %v1678, %v1902
  %v1904 = vpop.f32.mrb[0].mxu0
  %1905 = vmatprep.mubr.f32.mxu0 %v1426
  %1906 = vmatmul.mubr.f32.gmra.mrb[0].mxu0 %v1362
  %v1907 = vpop.f32.mrb[0].mxu0
  %v1908 = vadd.f32 %v1678, %v1907
  %v1909 = vpop.f32.mrb[0].mxu0
  %1910 = vmatprep.mubr.f32.mxu0 %v1427
  %1911 = vmatmul.mubr.f32.gmra.mrb[0].mxu0 %v1363
  %v1912 = vpop.f32.mrb[0].mxu0
  %v1913 = vadd.f32 %v1678, %v1912
  %v1914 = vpop.f32.mrb[0].mxu0
  %1915 = vmatprep.mubr.f32.mxu0 %v1428
  %1916 = vmatmul.mubr.f32.gmra.mrb[0].mxu0 %v1364
  %v1917 = vpop.f32.mrb[0].mxu0
  %v1918 = vadd.f32 %v1678, %v1917
  %v1919 = vpop.f32.mrb[0].mxu0
  %1920 = vmatprep.mubr.f32.mxu0 %v1429
  %1921 = vmatmul.mubr.f32.gmra.mrb[0].mxu0 %v1365
  %v1922 = vpop.f32.mrb[0].mxu0
  %v1923 = vadd.f32 %v1678, %v1922
  %v1924 = vpop.f32.mrb[0].mxu0
  %1925 = vmatprep.mubr.f32.mxu0 %v1430
  %1926 = vmatmul.mubr.f32.gmra.mrb[0].mxu0 %v1366
  %v1927 = vpop.f32.mrb[0].mxu0
  %v1928 = vadd.f32 %v1678, %v1927
  %v1929 = vpop.f32.mrb[0].mxu0
  %1930 = vmatprep.mubr.f32.mxu0 %v1431
  %1931 = vmatmul.mubr.f32.gmra.mrb[0].mxu0 %v1367
  %v1932 = vpop.f32.mrb[0].mxu0
  %v1933 = vadd.f32 %v1678, %v1932
  %v1934 = vpop.f32.mrb[0].mxu0
  %1935 = vmatprep.mubr.f32.mxu0 %v1432
  %1936 = vmatmul.mubr.f32.gmra.mrb[0].mxu0 %v1368
  %v1937 = vpop.f32.mrb[0].mxu0
  %v1938 = vadd.f32 %v1678, %v1937
  %v1939 = vpop.f32.mrb[0].mxu0
  %1940 = vmatprep.mubr.f32.mxu0 %v1433
  %1941 = vmatmul.mubr.f32.gmra.mrb[0].mxu0 %v1369
  %v1942 = vpop.f32.mrb[0].mxu0
  %v1943 = vadd.f32 %v1678, %v1942
  %v1944 = vpop.f32.mrb[0].mxu0
  %1945 = vmatprep.mubr.f32.mxu0 %v1434
  %1946 = vmatmul.mubr.f32.gmra.mrb[0].mxu0 %v1370
  %v1947 = vpop.f32.mrb[0].mxu0
  %v1948 = vadd.f32 %v1678, %v1947
  %v1949 = vpop.f32.mrb[0].mxu0
  %1950 = vmatprep.mubr.f32.mxu0 %v1435
  %1951 = vmatmul.mubr.f32.gmra.mrb[0].mxu0 %v1371
  %v1952 = vpop.f32.mrb[0].mxu0
  %v1953 = vadd.f32 %v1678, %v1952
  %v1954 = vpop.f32.mrb[0].mxu0
  %1955 = vmatprep.mubr.f32.mxu0 %v1436
  %1956 = vmatmul.mubr.f32.gmra.mrb[0].mxu0 %v1372
  %v1957 = vpop.f32.mrb[0].mxu0
  %v1958 = vadd.f32 %v1678, %v1957
  %v1959 = vpop.f32.mrb[0].mxu0
  %1960 = vmatprep.mubr.f32.mxu0 %v1437
  %1961 = vmatmul.mubr.f32.gmra.mrb[0].mxu0 %v1373
  %v1962 = vpop.f32.mrb[0].mxu0
  %v1963 = vadd.f32 %v1678, %v1962
  %v1964 = vpop.f32.mrb[0].mxu0
  %1965 = vmatprep.mubr.f32.mxu0 %v1438
  %1966 = vmatmul.mubr.f32.gmra.mrb[0].mxu0 %v1374
  %v1967 = vpop.f32.mrb[0].mxu0
  %v1968 = vadd.f32 %v1678, %v1967
  %v1969 = vpop.f32.mrb[0].mxu0
  %1970 = vmatprep.mubr.f32.mxu0 %v1439
  %1971 = vmatmul.mubr.f32.gmra.mrb[0].mxu0 %v1375
  %v1972 = vpop.f32.mrb[0].mxu0
  %v1973 = vadd.f32 %v1678, %v1972
  %v1974 = vpop.f32.mrb[0].mxu0
  %1975 = vmatprep.mubr.f32.mxu0 %v1440
  %1976 = vmatmul.mubr.f32.gmra.mrb[0].mxu0 %v1376
  %v1977 = vpop.f32.mrb[0].mxu0
  %v1978 = vadd.f32 %v1678, %v1977
  %v1979 = vpop.f32.mrb[0].mxu0
  %1980 = vmatprep.mubr.f32.mxu0 %v1441
  %1981 = vmatmul.mubr.f32.gmra.mrb[0].mxu0 %v1377
  %v1982 = vpop.f32.mrb[0].mxu0
  %v1983 = vadd.f32 %v1678, %v1982
  %v1984 = vpop.f32.mrb[0].mxu0
  %1985 = vmatprep.mubr.f32.mxu0 %v1442
  %1986 = vmatmul.mubr.f32.gmra.mrb[0].mxu0 %v1378
  %v1987 = vpop.f32.mrb[0].mxu0
  %v1988 = vadd.f32 %v1678, %v1987
  %v1989 = vpop.f32.mrb[0].mxu0
  %1990 = vmatprep.mubr.f32.mxu0 %v1443
  %1991 = vmatmul.mubr.f32.gmra.mrb[0].mxu0 %v1379
  %v1992 = vpop.f32.mrb[0].mxu0
  %v1993 = vadd.f32 %v1678, %v1992
  %v1994 = vpop.f32.mrb[0].mxu0
  %1995 = vmatprep.mubr.f32.mxu0 %v1444
  %1996 = vmatmul.mubr.f32.gmra.mrb[0].mxu0 %v1380
  %v1997 = vpop.f32.mrb[0].mxu0
  %v1998 = vadd.f32 %v1678, %v1997
  %v1999 = vpop.f32.mrb[0].mxu0
  %2000 = vmatprep.mubr.f32.mxu0 %v1445
  %2001 = vmatmul.mubr.f32.gmra.mrb[0].mxu0 %v1381
  %v2002 = vpop.f32.mrb[0].mxu0
  %v2003 = vadd.f32 %v1678, %v2002
  %v2004 = vpop.f32.mrb[0].mxu0
  %2005 = vmatprep.mubr.f32.mxu0 %v1446
  %2006 = vmatmul.mubr.f32.gmra.mrb[0].mxu0 %v1382
  %v2007 = vpop.f32.mrb[0].mxu0
  %v2008 = vadd.f32 %v1678, %v2007
  %v2009 = vpop.f32.mrb[0].mxu0
  %2010 = vmatprep.mubr.f32.mxu0 %v1447
  %2011 = vmatmul.mubr.f32.gmra.mrb[0].mxu0 %v1383
  %v2012 = vpop.f32.mrb[0].mxu0
  %v2013 = vadd.f32 %v1678, %v2012
  %v2014 = vpop.f32.mrb[0].mxu0
  %2015 = vmatprep.mubr.f32.mxu0 %v1448
  %2016 = vmatmul.mubr.f32.gmra.mrb[0].mxu0 %v1384
  %v2017 = vpop.f32.mrb[0].mxu0
  %v2018 = vadd.f32 %v1678, %v2017
  %v2019 = vpop.f32.mrb[0].mxu0
  %2020 = vmatprep.mubr.f32.mxu0 %v1449
  %2021 = vmatmul.mubr.f32.gmra.mrb[0].mxu0 %v1385
  %v2022 = vpop.f32.mrb[0].mxu0
  %v2023 = vadd.f32 %v1678, %v2022
  %v2024 = vpop.f32.mrb[0].mxu0
  %2025 = vmatprep.mubr.f32.mxu0 %v1450
  %2026 = vmatmul.mubr.f32.gmra.mrb[0].mxu0 %v1386
  %v2027 = vpop.f32.mrb[0].mxu0
  %v2028 = vadd.f32 %v1678, %v2027
  %v2029 = vpop.f32.mrb[0].mxu0
  %2030 = vmatprep.mubr.f32.mxu0 %v1451
  %2031 = vmatmul.mubr.f32.gmra.mrb[0].mxu0 %v1387
  %v2032 = vpop.f32.mrb[0].mxu0
  %v2033 = vadd.f32 %v1678, %v2032
  %v2034 = vpop.f32.mrb[0].mxu0
  %2035 = vmatprep.mubr.f32.mxu0 %v1452
  %2036 = vmatmul.mubr.f32.gmra.mrb[0].mxu0 %v1388
  %v2037 = vpop.f32.mrb[0].mxu0
  %v2038 = vadd.f32 %v1678, %v2037
  %v2039 = vpop.f32.mrb[0].mxu0
  %2040 = vmatprep.mubr.f32.mxu0 %v1453
  %2041 = vmatmul.mubr.f32.gmra.mrb[0].mxu0 %v1389
  %v2042 = vpop.f32.mrb[0].mxu0
  %v2043 = vpop.f32.mrb[0].mxu0
  %2044 = vmatprep.mubr.f32.mxu0 %v1454
  %2045 = vmatmul.mubr.f32.gmra.mrb[0].mxu0 %v1390
  %v2046 = vpop.f32.mrb[0].mxu0
  %v2047 = vpop.f32.mrb[0].mxu0
  %2048 = vmatprep.mubr.f32.mxu0 %v1455
  %2049 = vmatmul.mubr.f32.gmra.mrb[0].mxu0 %v1391
  %v2050 = vpop.f32.mrb[0].mxu0
  %v2051 = vpop.f32.mrb[0].mxu0
  %2052 = vmatprep.mubr.f32.mxu0 %v1456
  %2053 = vmatmul.mubr.f32.gmra.mrb[0].mxu0 %v1392
  %v2054 = vpop.f32.mrb[0].mxu0
  %v2055 = vpop.f32.mrb[0].mxu0
  %2056 = vdwg.mxu0
  %2057 = vmatprep.subr.mxu0 0.0
  %2058 = vmatpush1.msra.mxu0 %v1625
  %2059 = vmatprep.subr.mxu0 0.0
  %2060 = vmatpush1.msra.mxu0 %v1626
  %2061 = vmatprep.subr.mxu0 0.0
  %2062 = vmatpush1.msra.mxu0 %v1627
  %2063 = vmatprep.subr.mxu0 0.0
  %2064 = vmatpush1.msra.mxu0 %v1628
  %2065 = vmatprep.subr.mxu0 0.0
  %2066 = vmatpush1.msra.mxu0 %v1629
  %2067 = vmatprep.subr.mxu0 0.0
  %2068 = vmatpush1.msra.mxu0 %v1630
  %2069 = vmatprep.subr.mxu0 0.0
  %2070 = vmatpush1.msra.mxu0 %v1631
  %2071 = vmatprep.subr.mxu0 0.0
  %2072 = vmatpush1.msra.mxu0 %v1632
  %2073 = vmatprep.subr.mxu0 0.0
  %2074 = vmatpush1.msra.mxu0 %v1633
  %2075 = vmatprep.subr.mxu0 0.0
  %2076 = vmatpush1.msra.mxu0 %v1634
  %2077 = vmatprep.subr.mxu0 0.0
  %2078 = vmatpush1.msra.mxu0 %v1635
  %2079 = vmatprep.subr.mxu0 0.0
  %2080 = vmatpush1.msra.mxu0 %v1636
  %2081 = vmatprep.subr.mxu0 0.0
  %2082 = vmatpush1.msra.mxu0 %v1637
  %2083 = vmatprep.subr.mxu0 0.0
  %2084 = vmatpush1.msra.mxu0 %v1638
  %2085 = vmatprep.subr.mxu0 0.0
  %2086 = vmatpush1.msra.mxu0 %v1639
  %2087 = vmatprep.subr.mxu0 0.0
  %2088 = vmatpush1.msra.mxu0 %v1640
  %2089 = vmatprep.subr.mxu0 0.0
  %2090 = vmatpush1.msra.mxu0 %v1641
  %2091 = vmatprep.subr.mxu0 0.0
  %2092 = vmatpush1.msra.mxu0 %v1642
  %2093 = vmatprep.subr.mxu0 0.0
  %2094 = vmatpush1.msra.mxu0 %v1643
  %2095 = vmatprep.subr.mxu0 0.0
  %2096 = vmatpush1.msra.mxu0 %v1644
  %2097 = vmatprep.subr.mxu0 0.0
  %2098 = vmatpush1.msra.mxu0 %v1645
  %2099 = vmatprep.subr.mxu0 0.0
  %2100 = vmatpush1.msra.mxu0 %v1646
  %2101 = vmatprep.subr.mxu0 0.0
  %2102 = vmatpush1.msra.mxu0 %v1647
  %2103 = vmatprep.subr.mxu0 0.0
  %2104 = vmatpush1.msra.mxu0 %v1648
  %2105 = vmatprep.subr.mxu0 0.0
  %2106 = vmatpush1.msra.mxu0 %v1649
  %2107 = vmatprep.subr.mxu0 0.0
  %2108 = vmatpush1.msra.mxu0 %v1650
  %2109 = vmatprep.subr.mxu0 0.0
  %2110 = vmatpush1.msra.mxu0 %v1651
  %2111 = vmatprep.subr.mxu0 0.0
  %2112 = vmatpush1.msra.mxu0 %v1652
  %2113 = vmatprep.subr.mxu0 0.0
  %2114 = vmatpush1.msra.mxu0 %v1653
  %2115 = vmatprep.subr.mxu0 0.0
  %2116 = vmatpush1.msra.mxu0 %v1654
  %2117 = vmatprep.subr.mxu0 0.0
  %2118 = vmatpush1.msra.mxu0 %v1655
  %2119 = vmatprep.subr.mxu0 0.0
  %2120 = vmatpush1.msra.mxu0 %v1656
  %2121 = vmatprep.mubr.f32.mxu0 %v1333
  %2122 = vmatmul.mubr.f32.gmra.mrb[0].mxu0 %v1457
  %v2123 = vpop.f32.mrb[0].mxu0
  %v2124 = vadd.f32 %v1747, %v2123
  %v2125 = vpop.f32.mrb[0].mxu0
  %2126 = vmatprep.mubr.f32.mxu0 %v1334
  %2127 = vmatmul.mubr.f32.gmra.mrb[0].mxu0 %v1458
  %v2128 = vpop.f32.mrb[0].mxu0
  %v2129 = vadd.f32 %v1752, %v2128
  %v2130 = vpop.f32.mrb[0].mxu0
  %2131 = vmatprep.mubr.f32.mxu0 %v1335
  %2132 = vmatmul.mubr.f32.gmra.mrb[0].mxu0 %v1459
  %v2133 = vpop.f32.mrb[0].mxu0
  %v2134 = vadd.f32 %v1757, %v2133
  %v2135 = vpop.f32.mrb[0].mxu0
  %2136 = vmatprep.mubr.f32.mxu0 %v1336
  %2137 = vmatmul.mubr.f32.gmra.mrb[0].mxu0 %v1460
  %v2138 = vpop.f32.mrb[0].mxu0
  %v2139 = vadd.f32 %v1762, %v2138
  %v2140 = vpop.f32.mrb[0].mxu0
  %2141 = vmatprep.mubr.f32.mxu0 %v1337
  %2142 = vmatmul.mubr.f32.gmra.mrb[0].mxu0 %v1461
  %v2143 = vpop.f32.mrb[0].mxu0
  %v2144 = vadd.f32 %v1767, %v2143
  %v2145 = vpop.f32.mrb[0].mxu0
  %2146 = vmatprep.mubr.f32.mxu0 %v1338
  %2147 = vmatmul.mubr.f32.gmra.mrb[0].mxu0 %v1462
  %v2148 = vpop.f32.mrb[0].mxu0
  %v2149 = vadd.f32 %v1772, %v2148
  %v2150 = vpop.f32.mrb[0].mxu0
  %2151 = vmatprep.mubr.f32.mxu0 %v1339
  %2152 = vmatmul.mubr.f32.gmra.mrb[0].mxu0 %v1463
  %v2153 = vpop.f32.mrb[0].mxu0
  %v2154 = vadd.f32 %v1777, %v2153
  %v2155 = vpop.f32.mrb[0].mxu0
  %2156 = vmatprep.mubr.f32.mxu0 %v1340
  %2157 = vmatmul.mubr.f32.gmra.mrb[0].mxu0 %v1464
  %v2158 = vpop.f32.mrb[0].mxu0
  %v2159 = vadd.f32 %v1782, %v2158
  %v2160 = vpop.f32.mrb[0].mxu0
  %2161 = vmatprep.mubr.f32.mxu0 %v1341
  %2162 = vmatmul.mubr.f32.gmra.mrb[0].mxu0 %v1465
  %v2163 = vpop.f32.mrb[0].mxu0
  %v2164 = vadd.f32 %v1787, %v2163
  %v2165 = vpop.f32.mrb[0].mxu0
  %2166 = vmatprep.mubr.f32.mxu0 %v1342
  %2167 = vmatmul.mubr.f32.gmra.mrb[0].mxu0 %v1466
  %v2168 = vpop.f32.mrb[0].mxu0
  %v2169 = vadd.f32 %v1792, %v2168
  %v2170 = vpop.f32.mrb[0].mxu0
  %2171 = vmatprep.mubr.f32.mxu0 %v1343
  %2172 = vmatmul.mubr.f32.gmra.mrb[0].mxu0 %v1467
  %v2173 = vpop.f32.mrb[0].mxu0
  %v2174 = vadd.f32 %v1797, %v2173
  %v2175 = vpop.f32.mrb[0].mxu0
  %2176 = vmatprep.mubr.f32.mxu0 %v1344
  %2177 = vmatmul.mubr.f32.gmra.mrb[0].mxu0 %v1468
  %v2178 = vpop.f32.mrb[0].mxu0
  %v2179 = vadd.f32 %v1802, %v2178
  %v2180 = vpop.f32.mrb[0].mxu0
  %2181 = vmatprep.mubr.f32.mxu0 %v1345
  %2182 = vmatmul.mubr.f32.gmra.mrb[0].mxu0 %v1469
  %v2183 = vpop.f32.mrb[0].mxu0
  %v2184 = vadd.f32 %v1807, %v2183
  %v2185 = vpop.f32.mrb[0].mxu0
  %2186 = vmatprep.mubr.f32.mxu0 %v1346
  %2187 = vmatmul.mubr.f32.gmra.mrb[0].mxu0 %v1470
  %v2188 = vpop.f32.mrb[0].mxu0
  %v2189 = vadd.f32 %v1812, %v2188
  %v2190 = vpop.f32.mrb[0].mxu0
  %2191 = vmatprep.mubr.f32.mxu0 %v1347
  %2192 = vmatmul.mubr.f32.gmra.mrb[0].mxu0 %v1471
  %v2193 = vpop.f32.mrb[0].mxu0
  %v2194 = vadd.f32 %v1817, %v2193
  %v2195 = vpop.f32.mrb[0].mxu0
  %2196 = vmatprep.mubr.f32.mxu0 %v1348
  %2197 = vmatmul.mubr.f32.gmra.mrb[0].mxu0 %v1472
  %v2198 = vpop.f32.mrb[0].mxu0
  %v2199 = vadd.f32 %v1822, %v2198
  %v2200 = vpop.f32.mrb[0].mxu0
  %2201 = vmatprep.mubr.f32.mxu0 %v1349
  %2202 = vmatmul.mubr.f32.gmra.mrb[0].mxu0 %v1473
  %v2203 = vpop.f32.mrb[0].mxu0
  %v2204 = vadd.f32 %v1827, %v2203
  %v2205 = vpop.f32.mrb[0].mxu0
  %2206 = vmatprep.mubr.f32.mxu0 %v1350
  %2207 = vmatmul.mubr.f32.gmra.mrb[0].mxu0 %v1474
  %v2208 = vpop.f32.mrb[0].mxu0
  %v2209 = vadd.f32 %v1832, %v2208
  %v2210 = vpop.f32.mrb[0].mxu0
  %2211 = vmatprep.mubr.f32.mxu0 %v1351
  %2212 = vmatmul.mubr.f32.gmra.mrb[0].mxu0 %v1475
  %v2213 = vpop.f32.mrb[0].mxu0
  %v2214 = vadd.f32 %v1837, %v2213
  %v2215 = vpop.f32.mrb[0].mxu0
  %2216 = vmatprep.mubr.f32.mxu0 %v1352
  %2217 = vmatmul.mubr.f32.gmra.mrb[0].mxu0 %v1476
  %v2218 = vpop.f32.mrb[0].mxu0
  %v2219 = vadd.f32 %v1842, %v2218
  %v2220 = vpop.f32.mrb[0].mxu0
  %2221 = vmatprep.mubr.f32.mxu0 %v1353
  %2222 = vmatmul.mubr.f32.gmra.mrb[0].mxu0 %v1477
  %v2223 = vpop.f32.mrb[0].mxu0
  %v2224 = vadd.f32 %v1847, %v2223
  %v2225 = vpop.f32.mrb[0].mxu0
  %2226 = vmatprep.mubr.f32.mxu0 %v1354
  %2227 = vmatmul.mubr.f32.gmra.mrb[0].mxu0 %v1478
  %v2228 = vpop.f32.mrb[0].mxu0
  %v2229 = vadd.f32 %v1852, %v2228
  %v2230 = vpop.f32.mrb[0].mxu0
  %2231 = vmatprep.mubr.f32.mxu0 %v1355
  %2232 = vmatmul.mubr.f32.gmra.mrb[0].mxu0 %v1479
  %v2233 = vpop.f32.mrb[0].mxu0
  %v2234 = vadd.f32 %v1857, %v2233
  %v2235 = vpop.f32.mrb[0].mxu0
  %2236 = vmatprep.mubr.f32.mxu0 %v1356
  %2237 = vmatmul.mubr.f32.gmra.mrb[0].mxu0 %v1480
  %v2238 = vpop.f32.mrb[0].mxu0
  %v2239 = vadd.f32 %v1862, %v2238
  %v2240 = vpop.f32.mrb[0].mxu0
  %2241 = vmatprep.mubr.f32.mxu0 %v1357
  %2242 = vmatmul.mubr.f32.gmra.mrb[0].mxu0 %v1481
  %v2243 = vpop.f32.mrb[0].mxu0
  %v2244 = vadd.f32 %v1867, %v2243
  %v2245 = vpop.f32.mrb[0].mxu0
  %2246 = vmatprep.mubr.f32.mxu0 %v1358
  %2247 = vmatmul.mubr.f32.gmra.mrb[0].mxu0 %v1482
  %v2248 = vpop.f32.mrb[0].mxu0
  %v2249 = vadd.f32 %v1872, %v2248
  %v2250 = vpop.f32.mrb[0].mxu0
  %2251 = vmatprep.mubr.f32.mxu0 %v1359
  %2252 = vmatmul.mubr.f32.gmra.mrb[0].mxu0 %v1483
  %v2253 = vpop.f32.mrb[0].mxu0
  %v2254 = vadd.f32 %v1877, %v2253
  %v2255 = vpop.f32.mrb[0].mxu0
  %2256 = vmatprep.mubr.f32.mxu0 %v1360
  %2257 = vmatmul.mubr.f32.gmra.mrb[0].mxu0 %v1484
  %v2258 = vpop.f32.mrb[0].mxu0
  %v2259 = vadd.f32 %v1882, %v2258
  %v2260 = vpop.f32.mrb[0].mxu0
  %2261 = vmatprep.mubr.f32.mxu0 %v1521
  %2262 = vmatmul.mubr.f32.gmra.mrb[0].mxu0 %v1485
  %v2263 = vpop.f32.mrb[0].mxu0
  %v2264 = vpop.f32.mrb[0].mxu0
  %2265 = vmatprep.mubr.f32.mxu0 %v1522
  %2266 = vmatmul.mubr.f32.gmra.mrb[0].mxu0 %v1486
  %v2267 = vpop.f32.mrb[0].mxu0
  %v2268 = vpop.f32.mrb[0].mxu0
  %2269 = vmatprep.mubr.f32.mxu0 %v1523
  %2270 = vmatmul.mubr.f32.gmra.mrb[0].mxu0 %v1487
  %v2271 = vpop.f32.mrb[0].mxu0
  %v2272 = vpop.f32.mrb[0].mxu0
  %2273 = vmatprep.mubr.f32.mxu0 %v1524
  %2274 = vmatmul.mubr.f32.gmra.mrb[0].mxu0 %v1488
  %v2275 = vpop.f32.mrb[0].mxu0
  %v2276 = vpop.f32.mrb[0].mxu0
  %2277 = vmatprep.mubr.f32.mxu0 %v1365
  %2278 = vmatmul.mubr.f32.gmra.mrb[0].mxu0 %v1489
  %v2279 = vpop.f32.mrb[0].mxu0
  %v2280 = vadd.f32 %v1903, %v2279
  %v2281 = vpop.f32.mrb[0].mxu0
  %2282 = vmatprep.mubr.f32.mxu0 %v1366
  %2283 = vmatmul.mubr.f32.gmra.mrb[0].mxu0 %v1490
  %v2284 = vpop.f32.mrb[0].mxu0
  %v2285 = vadd.f32 %v1908, %v2284
  %v2286 = vpop.f32.mrb[0].mxu0
  %2287 = vmatprep.mubr.f32.mxu0 %v1367
  %2288 = vmatmul.mubr.f32.gmra.mrb[0].mxu0 %v1491
  %v2289 = vpop.f32.mrb[0].mxu0
  %v2290 = vadd.f32 %v1913, %v2289
  %v2291 = vpop.f32.mrb[0].mxu0
  %2292 = vmatprep.mubr.f32.mxu0 %v1368
  %2293 = vmatmul.mubr.f32.gmra.mrb[0].mxu0 %v1492
  %v2294 = vpop.f32.mrb[0].mxu0
  %v2295 = vadd.f32 %v1918, %v2294
  %v2296 = vpop.f32.mrb[0].mxu0
  %2297 = vmatprep.mubr.f32.mxu0 %v1369
  %2298 = vmatmul.mubr.f32.gmra.mrb[0].mxu0 %v1493
  %v2299 = vpop.f32.mrb[0].mxu0
  %v2300 = vadd.f32 %v1923, %v2299
  %v2301 = vpop.f32.mrb[0].mxu0
  %2302 = vmatprep.mubr.f32.mxu0 %v1370
  %2303 = vmatmul.mubr.f32.gmra.mrb[0].mxu0 %v1494
  %v2304 = vpop.f32.mrb[0].mxu0
  %v2305 = vadd.f32 %v1928, %v2304
  %v2306 = vpop.f32.mrb[0].mxu0
  %2307 = vmatprep.mubr.f32.mxu0 %v1371
  %2308 = vmatmul.mubr.f32.gmra.mrb[0].mxu0 %v1495
  %v2309 = vpop.f32.mrb[0].mxu0
  %v2310 = vadd.f32 %v1933, %v2309
  %v2311 = vpop.f32.mrb[0].mxu0
  %2312 = vmatprep.mubr.f32.mxu0 %v1372
  %2313 = vmatmul.mubr.f32.gmra.mrb[0].mxu0 %v1496
  %v2314 = vpop.f32.mrb[0].mxu0
  %v2315 = vadd.f32 %v1938, %v2314
  %v2316 = vpop.f32.mrb[0].mxu0
  %2317 = vmatprep.mubr.f32.mxu0 %v1373
  %2318 = vmatmul.mubr.f32.gmra.mrb[0].mxu0 %v1497
  %v2319 = vpop.f32.mrb[0].mxu0
  %v2320 = vadd.f32 %v1943, %v2319
  %v2321 = vpop.f32.mrb[0].mxu0
  %2322 = vmatprep.mubr.f32.mxu0 %v1374
  %2323 = vmatmul.mubr.f32.gmra.mrb[0].mxu0 %v1498
  %v2324 = vpop.f32.mrb[0].mxu0
  %v2325 = vadd.f32 %v1948, %v2324
  %v2326 = vpop.f32.mrb[0].mxu0
  %2327 = vmatprep.mubr.f32.mxu0 %v1375
  %2328 = vmatmul.mubr.f32.gmra.mrb[0].mxu0 %v1499
  %v2329 = vpop.f32.mrb[0].mxu0
  %v2330 = vadd.f32 %v1953, %v2329
  %v2331 = vpop.f32.mrb[0].mxu0
  %2332 = vmatprep.mubr.f32.mxu0 %v1376
  %2333 = vmatmul.mubr.f32.gmra.mrb[0].mxu0 %v1500
  %v2334 = vpop.f32.mrb[0].mxu0
  %v2335 = vadd.f32 %v1958, %v2334
  %v2336 = vpop.f32.mrb[0].mxu0
  %2337 = vmatprep.mubr.f32.mxu0 %v1377
  %2338 = vmatmul.mubr.f32.gmra.mrb[0].mxu0 %v1501
  %v2339 = vpop.f32.mrb[0].mxu0
  %v2340 = vadd.f32 %v1963, %v2339
  %v2341 = vpop.f32.mrb[0].mxu0
  %2342 = vmatprep.mubr.f32.mxu0 %v1378
  %2343 = vmatmul.mubr.f32.gmra.mrb[0].mxu0 %v1502
  %v2344 = vpop.f32.mrb[0].mxu0
  %v2345 = vadd.f32 %v1968, %v2344
  %v2346 = vpop.f32.mrb[0].mxu0
  %2347 = vmatprep.mubr.f32.mxu0 %v1379
  %2348 = vmatmul.mubr.f32.gmra.mrb[0].mxu0 %v1503
  %v2349 = vpop.f32.mrb[0].mxu0
  %v2350 = vadd.f32 %v1973, %v2349
  %v2351 = vpop.f32.mrb[0].mxu0
  %2352 = vmatprep.mubr.f32.mxu0 %v1380
  %2353 = vmatmul.mubr.f32.gmra.mrb[0].mxu0 %v1504
  %v2354 = vpop.f32.mrb[0].mxu0
  %v2355 = vadd.f32 %v1978, %v2354
  %v2356 = vpop.f32.mrb[0].mxu0
  %2357 = vmatprep.mubr.f32.mxu0 %v1381
  %2358 = vmatmul.mubr.f32.gmra.mrb[0].mxu0 %v1505
  %v2359 = vpop.f32.mrb[0].mxu0
  %v2360 = vadd.f32 %v1983, %v2359
  %v2361 = vpop.f32.mrb[0].mxu0
  %2362 = vmatprep.mubr.f32.mxu0 %v1382
  %2363 = vmatmul.mubr.f32.gmra.mrb[0].mxu0 %v1506
  %v2364 = vpop.f32.mrb[0].mxu0
  %v2365 = vadd.f32 %v1988, %v2364
  %v2366 = vpop.f32.mrb[0].mxu0
  %2367 = vmatprep.mubr.f32.mxu0 %v1383
  %2368 = vmatmul.mubr.f32.gmra.mrb[0].mxu0 %v1507
  %v2369 = vpop.f32.mrb[0].mxu0
  %v2370 = vadd.f32 %v1993, %v2369
  %v2371 = vpop.f32.mrb[0].mxu0
  %2372 = vmatprep.mubr.f32.mxu0 %v1384
  %2373 = vmatmul.mubr.f32.gmra.mrb[0].mxu0 %v1508
  %v2374 = vpop.f32.mrb[0].mxu0
  %v2375 = vadd.f32 %v1998, %v2374
  %v2376 = vpop.f32.mrb[0].mxu0
  %2377 = vmatprep.mubr.f32.mxu0 %v1385
  %2378 = vmatmul.mubr.f32.gmra.mrb[0].mxu0 %v1509
  %v2379 = vpop.f32.mrb[0].mxu0
  %v2380 = vadd.f32 %v2003, %v2379
  %v2381 = vpop.f32.mrb[0].mxu0
  %2382 = vmatprep.mubr.f32.mxu0 %v1386
  %2383 = vmatmul.mubr.f32.gmra.mrb[0].mxu0 %v1510
  %v2384 = vpop.f32.mrb[0].mxu0
  %v2385 = vadd.f32 %v2008, %v2384
  %v2386 = vpop.f32.mrb[0].mxu0
  %2387 = vmatprep.mubr.f32.mxu0 %v1387
  %2388 = vmatmul.mubr.f32.gmra.mrb[0].mxu0 %v1511
  %v2389 = vpop.f32.mrb[0].mxu0
  %v2390 = vadd.f32 %v2013, %v2389
  %v2391 = vpop.f32.mrb[0].mxu0
  %2392 = vmatprep.mubr.f32.mxu0 %v1388
  %2393 = vmatmul.mubr.f32.gmra.mrb[0].mxu0 %v1512
  %v2394 = vpop.f32.mrb[0].mxu0
  %v2395 = vadd.f32 %v2018, %v2394
  %v2396 = vpop.f32.mrb[0].mxu0
  %2397 = vmatprep.mubr.f32.mxu0 %v1389
  %2398 = vmatmul.mubr.f32.gmra.mrb[0].mxu0 %v1513
  %v2399 = vpop.f32.mrb[0].mxu0
  %v2400 = vadd.f32 %v2023, %v2399
  %v2401 = vpop.f32.mrb[0].mxu0
  %2402 = vmatprep.mubr.f32.mxu0 %v1390
  %2403 = vmatmul.mubr.f32.gmra.mrb[0].mxu0 %v1514
  %v2404 = vpop.f32.mrb[0].mxu0
  %v2405 = vadd.f32 %v2028, %v2404
  %v2406 = vpop.f32.mrb[0].mxu0
  %2407 = vmatprep.mubr.f32.mxu0 %v1391
  %2408 = vmatmul.mubr.f32.gmra.mrb[0].mxu0 %v1515
  %v2409 = vpop.f32.mrb[0].mxu0
  %v2410 = vadd.f32 %v2033, %v2409
  %v2411 = vpop.f32.mrb[0].mxu0
  %2412 = vmatprep.mubr.f32.mxu0 %v1392
  %2413 = vmatmul.mubr.f32.gmra.mrb[0].mxu0 %v1516
  %v2414 = vpop.f32.mrb[0].mxu0
  %v2415 = vadd.f32 %v2038, %v2414
  %v2416 = vpop.f32.mrb[0].mxu0
  %2417 = vmatprep.mubr.f32.mxu0 %v1525
  %2418 = vmatmul.mubr.f32.gmra.mrb[0].mxu0 %v1517
  %v2419 = vpop.f32.mrb[0].mxu0
  %v2420 = vpop.f32.mrb[0].mxu0
  %2421 = vmatprep.mubr.f32.mxu0 %v1526
  %2422 = vmatmul.mubr.f32.gmra.mrb[0].mxu0 %v1518
  %v2423 = vpop.f32.mrb[0].mxu0
  %v2424 = vpop.f32.mrb[0].mxu0
  %2425 = vmatprep.mubr.f32.mxu0 %v1527
  %2426 = vmatmul.mubr.f32.gmra.mrb[0].mxu0 %v1519
  %v2427 = vpop.f32.mrb[0].mxu0
  %v2428 = vpop.f32.mrb[0].mxu0
  %2429 = vmatprep.mubr.f32.mxu0 %v1528
  %2430 = vmatmul.mubr.f32.gmra.mrb[0].mxu0 %v1520
  %v2431 = vpop.f32.mrb[0].mxu0
  %v2432 = vpop.f32.mrb[0].mxu0
  %2433 = vdwg.mxu0
  %2434 = vmatprep.subr.mxu0 0.0
  %2435 = vmatpush1.msra.mxu0 %v1657
  %2436 = vmatprep.subr.mxu0 0.0
  %2437 = vmatpush1.msra.mxu0 %v1658
  %2438 = vmatprep.subr.mxu0 0.0
  %2439 = vmatpush1.msra.mxu0 %v1659
  %2440 = vmatprep.subr.mxu0 0.0
  %2441 = vmatpush1.msra.mxu0 %v1660
  %2442 = vmatprep.subr.mxu0 0.0
  %2443 = vmatpush1.msra.mxu0 %v1661
  %2444 = vmatprep.subr.mxu0 0.0
  %2445 = vmatpush1.msra.mxu0 %v1662
  %2446 = vmatprep.subr.mxu0 0.0
  %2447 = vmatpush1.msra.mxu0 %v1663
  %2448 = vmatprep.subr.mxu0 0.0
  %2449 = vmatpush1.msra.mxu0 %v1664
  %2450 = vmatprep.subr.mxu0 0.0
  %2451 = vmatpush1.msra.mxu0 %v1665
  %2452 = vmatprep.subr.mxu0 0.0
  %2453 = vmatpush1.msra.mxu0 %v1666
  %2454 = vmatprep.subr.mxu0 0.0
  %2455 = vmatpush1.msra.mxu0 %v1667
  %2456 = vmatprep.subr.mxu0 0.0
  %2457 = vmatpush1.msra.mxu0 %v1668
  %2458 = vmatprep.subr.mxu0 0.0
  %2459 = vmatpush1.msra.mxu0 %v1669
  %2460 = vmatprep.subr.mxu0 0.0
  %2461 = vmatpush1.msra.mxu0 %v1670
  %2462 = vmatprep.subr.mxu0 0.0
  %2463 = vmatpush1.msra.mxu0 %v1671
  %2464 = vmatprep.subr.mxu0 0.0
  %2465 = vmatpush1.msra.mxu0 %v1672
  %2466 = vmatprep.subr.mxu0 0.0
  %2467 = vmatpush1.msra.mxu0 0.0
  %2468 = vmatprep.subr.mxu0 0.0
  %2469 = vmatpush1.msra.mxu0 0.0
  %2470 = vmatprep.subr.mxu0 0.0
  %2471 = vmatpush1.msra.mxu0 0.0
  %2472 = vmatprep.subr.mxu0 0.0
  %2473 = vmatpush1.msra.mxu0 0.0
  %2474 = vmatprep.subr.mxu0 0.0
  %2475 = vmatpush1.msra.mxu0 0.0
  %2476 = vmatprep.subr.mxu0 0.0
  %2477 = vmatpush1.msra.mxu0 0.0
  %2478 = vmatprep.subr.mxu0 0.0
  %2479 = vmatpush1.msra.mxu0 0.0
  %2480 = vmatprep.subr.mxu0 0.0
  %2481 = vmatpush1.msra.mxu0 0.0
  %2482 = vmatprep.subr.mxu0 0.0
  %2483 = vmatpush1.msra.mxu0 0.0
  %2484 = vmatprep.subr.mxu0 0.0
  %2485 = vmatpush1.msra.mxu0 0.0
  %2486 = vmatprep.subr.mxu0 0.0
  %2487 = vmatpush1.msra.mxu0 0.0
  %2488 = vmatprep.subr.mxu0 0.0
  %2489 = vmatpush1.msra.mxu0 0.0
  %2490 = vmatprep.subr.mxu0 0.0
  %2491 = vmatpush1.msra.mxu0 0.0
  %2492 = vmatprep.subr.mxu0 0.0
  %2493 = vmatpush1.msra.mxu0 0.0
  %2494 = vmatprep.subr.mxu0 0.0
  %2495 = vmatpush1.msra.mxu0 0.0
  %2496 = vmatprep.subr.mxu0 0.0
  %2497 = vmatpush1.msra.mxu0 0.0
  %2498 = vmatprep.mubr.f32.mxu0 0.0
  %2499 = vmatmul.mubr.f32.gmra.mrb[0].mxu0 %v1529
  %v2500 = vpop.f32.mrb[0].mxu0
  %v2501 = vadd.f32 %v2124, %v2500
  %v2502 = vpop.f32.mrb[0].mxu0
  %2503 = vmatprep.mubr.f32.mxu0 0.0
  %2504 = vmatmul.mubr.f32.gmra.mrb[0].mxu0 %v1530
  %v2505 = vpop.f32.mrb[0].mxu0
  %v2506 = vadd.f32 %v2129, %v2505
  %v2507 = vpop.f32.mrb[0].mxu0
  %2508 = vmatprep.mubr.f32.mxu0 0.0
  %2509 = vmatmul.mubr.f32.gmra.mrb[0].mxu0 %v1531
  %v2510 = vpop.f32.mrb[0].mxu0
  %v2511 = vadd.f32 %v2134, %v2510
  %v2512 = vpop.f32.mrb[0].mxu0
  %2513 = vmatprep.mubr.f32.mxu0 0.0
  %2514 = vmatmul.mubr.f32.gmra.mrb[0].mxu0 %v1532
  %v2515 = vpop.f32.mrb[0].mxu0
  %v2516 = vadd.f32 %v2139, %v2515
  %v2517 = vpop.f32.mrb[0].mxu0
  %2518 = vmatprep.mubr.f32.mxu0 0.0
  %2519 = vmatmul.mubr.f32.gmra.mrb[0].mxu0 %v1533
  %v2520 = vpop.f32.mrb[0].mxu0
  %v2521 = vadd.f32 %v2144, %v2520
  %v2522 = vpop.f32.mrb[0].mxu0
  %2523 = vmatprep.mubr.f32.mxu0 0.0
  %2524 = vmatmul.mubr.f32.gmra.mrb[0].mxu0 %v1534
  %v2525 = vpop.f32.mrb[0].mxu0
  %v2526 = vadd.f32 %v2149, %v2525
  %v2527 = vpop.f32.mrb[0].mxu0
  %2528 = vmatprep.mubr.f32.mxu0 0.0
  %2529 = vmatmul.mubr.f32.gmra.mrb[0].mxu0 %v1535
  %v2530 = vpop.f32.mrb[0].mxu0
  %v2531 = vadd.f32 %v2154, %v2530
  %v2532 = vpop.f32.mrb[0].mxu0
  %2533 = vmatprep.mubr.f32.mxu0 0.0
  %2534 = vmatmul.mubr.f32.gmra.mrb[0].mxu0 %v1536
  %v2535 = vpop.f32.mrb[0].mxu0
  %v2536 = vadd.f32 %v2159, %v2535
  %v2537 = vpop.f32.mrb[0].mxu0
  %2538 = vmatprep.mubr.f32.mxu0 0.0
  %2539 = vmatmul.mubr.f32.gmra.mrb[0].mxu0 %v1537
  %v2540 = vpop.f32.mrb[0].mxu0
  %v2541 = vadd.f32 %v2164, %v2540
  %v2542 = vpop.f32.mrb[0].mxu0
  %2543 = vmatprep.mubr.f32.mxu0 0.0
  %2544 = vmatmul.mubr.f32.gmra.mrb[0].mxu0 %v1538
  %v2545 = vpop.f32.mrb[0].mxu0
  %v2546 = vadd.f32 %v2169, %v2545
  %v2547 = vpop.f32.mrb[0].mxu0
  %2548 = vmatprep.mubr.f32.mxu0 0.0
  %2549 = vmatmul.mubr.f32.gmra.mrb[0].mxu0 %v1539
  %v2550 = vpop.f32.mrb[0].mxu0
  %v2551 = vadd.f32 %v2174, %v2550
  %v2552 = vpop.f32.mrb[0].mxu0
  %2553 = vmatprep.mubr.f32.mxu0 0.0
  %2554 = vmatmul.mubr.f32.gmra.mrb[0].mxu0 %v1540
  %v2555 = vpop.f32.mrb[0].mxu0
  %v2556 = vadd.f32 %v2179, %v2555
  %v2557 = vpop.f32.mrb[0].mxu0
  %2558 = vmatprep.mubr.f32.mxu0 0.0
  %2559 = vmatmul.mubr.f32.gmra.mrb[0].mxu0 %v1541
  %v2560 = vpop.f32.mrb[0].mxu0
  %v2561 = vadd.f32 %v2184, %v2560
  %v2562 = vpop.f32.mrb[0].mxu0
  %2563 = vmatprep.mubr.f32.mxu0 0.0
  %2564 = vmatmul.mubr.f32.gmra.mrb[0].mxu0 %v1542
  %v2565 = vpop.f32.mrb[0].mxu0
  %v2566 = vadd.f32 %v2189, %v2565
  %v2567 = vpop.f32.mrb[0].mxu0
  %2568 = vmatprep.mubr.f32.mxu0 0.0
  %2569 = vmatmul.mubr.f32.gmra.mrb[0].mxu0 %v1543
  %v2570 = vpop.f32.mrb[0].mxu0
  %v2571 = vadd.f32 %v2194, %v2570
  %v2572 = vpop.f32.mrb[0].mxu0
  %2573 = vmatprep.mubr.f32.mxu0 0.0
  %2574 = vmatmul.mubr.f32.gmra.mrb[0].mxu0 %v1544
  %v2575 = vpop.f32.mrb[0].mxu0
  %v2576 = vadd.f32 %v2199, %v2575
  %v2577 = vpop.f32.mrb[0].mxu0
  %2578 = vmatprep.mubr.f32.mxu0 0.0
  %2579 = vmatmul.mubr.f32.gmra.mrb[0].mxu0 %v1545
  %v2580 = vpop.f32.mrb[0].mxu0
  %v2581 = vadd.f32 %v2204, %v2580
  %v2582 = vpop.f32.mrb[0].mxu0
  %2583 = vmatprep.mubr.f32.mxu0 0.0
  %2584 = vmatmul.mubr.f32.gmra.mrb[0].mxu0 %v1546
  %v2585 = vpop.f32.mrb[0].mxu0
  %v2586 = vadd.f32 %v2209, %v2585
  %v2587 = vpop.f32.mrb[0].mxu0
  %2588 = vmatprep.mubr.f32.mxu0 0.0
  %2589 = vmatmul.mubr.f32.gmra.mrb[0].mxu0 %v1547
  %v2590 = vpop.f32.mrb[0].mxu0
  %v2591 = vadd.f32 %v2214, %v2590
  %v2592 = vpop.f32.mrb[0].mxu0
  %2593 = vmatprep.mubr.f32.mxu0 0.0
  %2594 = vmatmul.mubr.f32.gmra.mrb[0].mxu0 %v1548
  %v2595 = vpop.f32.mrb[0].mxu0
  %v2596 = vadd.f32 %v2219, %v2595
  %v2597 = vpop.f32.mrb[0].mxu0
  %2598 = vmatprep.mubr.f32.mxu0 0.0
  %2599 = vmatmul.mubr.f32.gmra.mrb[0].mxu0 %v1549
  %v2600 = vpop.f32.mrb[0].mxu0
  %v2601 = vadd.f32 %v2224, %v2600
  %v2602 = vpop.f32.mrb[0].mxu0
  %2603 = vmatprep.mubr.f32.mxu0 0.0
  %2604 = vmatmul.mubr.f32.gmra.mrb[0].mxu0 %v1550
  %v2605 = vpop.f32.mrb[0].mxu0
  %v2606 = vadd.f32 %v2229, %v2605
  %v2607 = vpop.f32.mrb[0].mxu0
  %2608 = vmatprep.mubr.f32.mxu0 0.0
  %2609 = vmatmul.mubr.f32.gmra.mrb[0].mxu0 %v1551
  %v2610 = vpop.f32.mrb[0].mxu0
  %v2611 = vadd.f32 %v2234, %v2610
  %v2612 = vpop.f32.mrb[0].mxu0
  %2613 = vmatprep.mubr.f32.mxu0 0.0
  %2614 = vmatmul.mubr.f32.gmra.mrb[0].mxu0 %v1552
  %v2615 = vpop.f32.mrb[0].mxu0
  %v2616 = vadd.f32 %v2239, %v2615
  %v2617 = vpop.f32.mrb[0].mxu0
  %2618 = vmatprep.mubr.f32.mxu0 0.0
  %2619 = vmatmul.mubr.f32.gmra.mrb[0].mxu0 %v1553
  %v2620 = vpop.f32.mrb[0].mxu0
  %v2621 = vadd.f32 %v2244, %v2620
  %v2622 = vpop.f32.mrb[0].mxu0
  %2623 = vmatprep.mubr.f32.mxu0 0.0
  %2624 = vmatmul.mubr.f32.gmra.mrb[0].mxu0 %v1554
  %v2625 = vpop.f32.mrb[0].mxu0
  %v2626 = vadd.f32 %v2249, %v2625
  %v2627 = vpop.f32.mrb[0].mxu0
  %2628 = vmatprep.mubr.f32.mxu0 0.0
  %2629 = vmatmul.mubr.f32.gmra.mrb[0].mxu0 %v1555
  %v2630 = vpop.f32.mrb[0].mxu0
  %v2631 = vadd.f32 %v2254, %v2630
  %v2632 = vpop.f32.mrb[0].mxu0
  %2633 = vmatprep.mubr.f32.mxu0 0.0
  %2634 = vmatmul.mubr.f32.gmra.mrb[0].mxu0 %v1556
  %v2635 = vpop.f32.mrb[0].mxu0
  %v2636 = vadd.f32 %v2259, %v2635
  %v2637 = vpop.f32.mrb[0].mxu0
  %2638 = vmatprep.mubr.f32.mxu0 0.0
  %2639 = vmatmul.mubr.f32.gmra.mrb[0].mxu0 %v1557
  %v2640 = vpop.f32.mrb[0].mxu0
  %v2641 = vpop.f32.mrb[0].mxu0
  %2642 = vmatprep.mubr.f32.mxu0 0.0
  %2643 = vmatmul.mubr.f32.gmra.mrb[0].mxu0 %v1558
  %v2644 = vpop.f32.mrb[0].mxu0
  %v2645 = vpop.f32.mrb[0].mxu0
  %2646 = vmatprep.mubr.f32.mxu0 0.0
  %2647 = vmatmul.mubr.f32.gmra.mrb[0].mxu0 %v1559
  %v2648 = vpop.f32.mrb[0].mxu0
  %v2649 = vpop.f32.mrb[0].mxu0
  %2650 = vmatprep.mubr.f32.mxu0 0.0
  %2651 = vmatmul.mubr.f32.gmra.mrb[0].mxu0 %v1560
  %v2652 = vpop.f32.mrb[0].mxu0
  %v2653 = vpop.f32.mrb[0].mxu0
  %2654 = vmatprep.mubr.f32.mxu0 0.0
  %2655 = vmatmul.mubr.f32.gmra.mrb[0].mxu0 %v1561
  %v2656 = vpop.f32.mrb[0].mxu0
  %v2657 = vadd.f32 %v2280, %v2656
  %v2658 = vpop.f32.mrb[0].mxu0
  %2659 = vmatprep.mubr.f32.mxu0 0.0
  %2660 = vmatmul.mubr.f32.gmra.mrb[0].mxu0 %v1562
  %v2661 = vpop.f32.mrb[0].mxu0
  %v2662 = vadd.f32 %v2285, %v2661
  %v2663 = vpop.f32.mrb[0].mxu0
  %2664 = vmatprep.mubr.f32.mxu0 0.0
  %2665 = vmatmul.mubr.f32.gmra.mrb[0].mxu0 %v1563
  %v2666 = vpop.f32.mrb[0].mxu0
  %v2667 = vadd.f32 %v2290, %v2666
  %v2668 = vpop.f32.mrb[0].mxu0
  %2669 = vmatprep.mubr.f32.mxu0 0.0
  %2670 = vmatmul.mubr.f32.gmra.mrb[0].mxu0 %v1564
  %v2671 = vpop.f32.mrb[0].mxu0
  %v2672 = vadd.f32 %v2295, %v2671
  %v2673 = vpop.f32.mrb[0].mxu0
  %2674 = vmatprep.mubr.f32.mxu0 0.0
  %2675 = vmatmul.mubr.f32.gmra.mrb[0].mxu0 %v1565
  %v2676 = vpop.f32.mrb[0].mxu0
  %v2677 = vadd.f32 %v2300, %v2676
  %v2678 = vpop.f32.mrb[0].mxu0
  %2679 = vmatprep.mubr.f32.mxu0 0.0
  %2680 = vmatmul.mubr.f32.gmra.mrb[0].mxu0 %v1566
  %v2681 = vpop.f32.mrb[0].mxu0
  %v2682 = vadd.f32 %v2305, %v2681
  %v2683 = vpop.f32.mrb[0].mxu0
  %2684 = vmatprep.mubr.f32.mxu0 0.0
  %2685 = vmatmul.mubr.f32.gmra.mrb[0].mxu0 %v1567
  %v2686 = vpop.f32.mrb[0].mxu0
  %v2687 = vadd.f32 %v2310, %v2686
  %v2688 = vpop.f32.mrb[0].mxu0
  %2689 = vmatprep.mubr.f32.mxu0 0.0
  %2690 = vmatmul.mubr.f32.gmra.mrb[0].mxu0 %v1568
  %v2691 = vpop.f32.mrb[0].mxu0
  %v2692 = vadd.f32 %v2315, %v2691
  %v2693 = vpop.f32.mrb[0].mxu0
  %2694 = vmatprep.mubr.f32.mxu0 0.0
  %2695 = vmatmul.mubr.f32.gmra.mrb[0].mxu0 %v1569
  %v2696 = vpop.f32.mrb[0].mxu0
  %v2697 = vadd.f32 %v2320, %v2696
  %v2698 = vpop.f32.mrb[0].mxu0
  %2699 = vmatprep.mubr.f32.mxu0 0.0
  %2700 = vmatmul.mubr.f32.gmra.mrb[0].mxu0 %v1570
  %v2701 = vpop.f32.mrb[0].mxu0
  %v2702 = vadd.f32 %v2325, %v2701
  %v2703 = vpop.f32.mrb[0].mxu0
  %2704 = vmatprep.mubr.f32.mxu0 0.0
  %2705 = vmatmul.mubr.f32.gmra.mrb[0].mxu0 %v1571
  %v2706 = vpop.f32.mrb[0].mxu0
  %v2707 = vadd.f32 %v2330, %v2706
  %v2708 = vpop.f32.mrb[0].mxu0
  %2709 = vmatprep.mubr.f32.mxu0 0.0
  %2710 = vmatmul.mubr.f32.gmra.mrb[0].mxu0 %v1572
  %v2711 = vpop.f32.mrb[0].mxu0
  %v2712 = vadd.f32 %v2335, %v2711
  %v2713 = vpop.f32.mrb[0].mxu0
  %2714 = vmatprep.mubr.f32.mxu0 0.0
  %2715 = vmatmul.mubr.f32.gmra.mrb[0].mxu0 %v1573
  %v2716 = vpop.f32.mrb[0].mxu0
  %v2717 = vadd.f32 %v2340, %v2716
  %v2718 = vpop.f32.mrb[0].mxu0
  %2719 = vmatprep.mubr.f32.mxu0 0.0
  %2720 = vmatmul.mubr.f32.gmra.mrb[0].mxu0 %v1574
  %v2721 = vpop.f32.mrb[0].mxu0
  %v2722 = vadd.f32 %v2345, %v2721
  %v2723 = vpop.f32.mrb[0].mxu0
  %2724 = vmatprep.mubr.f32.mxu0 0.0
  %2725 = vmatmul.mubr.f32.gmra.mrb[0].mxu0 %v1575
  %v2726 = vpop.f32.mrb[0].mxu0
  %v2727 = vadd.f32 %v2350, %v2726
  %v2728 = vpop.f32.mrb[0].mxu0
  %2729 = vmatprep.mubr.f32.mxu0 0.0
  %2730 = vmatmul.mubr.f32.gmra.mrb[0].mxu0 %v1576
  %v2731 = vpop.f32.mrb[0].mxu0
  %v2732 = vadd.f32 %v2355, %v2731
  %v2733 = vpop.f32.mrb[0].mxu0
  %2734 = vmatprep.mubr.f32.mxu0 0.0
  %2735 = vmatmul.mubr.f32.gmra.mrb[0].mxu0 %v1577
  %v2736 = vpop.f32.mrb[0].mxu0
  %v2737 = vadd.f32 %v2360, %v2736
  %v2738 = vpop.f32.mrb[0].mxu0
  %2739 = vmatprep.mubr.f32.mxu0 0.0
  %2740 = vmatmul.mubr.f32.gmra.mrb[0].mxu0 %v1578
  %v2741 = vpop.f32.mrb[0].mxu0
  %v2742 = vadd.f32 %v2365, %v2741
  %v2743 = vpop.f32.mrb[0].mxu0
  %2744 = vmatprep.mubr.f32.mxu0 0.0
  %2745 = vmatmul.mubr.f32.gmra.mrb[0].mxu0 %v1579
  %v2746 = vpop.f32.mrb[0].mxu0
  %v2747 = vadd.f32 %v2370, %v2746
  %v2748 = vpop.f32.mrb[0].mxu0
  %2749 = vmatprep.mubr.f32.mxu0 0.0
  %2750 = vmatmul.mubr.f32.gmra.mrb[0].mxu0 %v1580
  %v2751 = vpop.f32.mrb[0].mxu0
  %v2752 = vadd.f32 %v2375, %v2751
  %v2753 = vpop.f32.mrb[0].mxu0
  %2754 = vmatprep.mubr.f32.mxu0 0.0
  %2755 = vmatmul.mubr.f32.gmra.mrb[0].mxu0 %v1581
  %v2756 = vpop.f32.mrb[0].mxu0
  %v2757 = vadd.f32 %v2380, %v2756
  %v2758 = vpop.f32.mrb[0].mxu0
  %2759 = vmatprep.mubr.f32.mxu0 0.0
  %2760 = vmatmul.mubr.f32.gmra.mrb[0].mxu0 %v1582
  %v2761 = vpop.f32.mrb[0].mxu0
  %v2762 = vadd.f32 %v2385, %v2761
  %v2763 = vpop.f32.mrb[0].mxu0
  %2764 = vmatprep.mubr.f32.mxu0 0.0
  %2765 = vmatmul.mubr.f32.gmra.mrb[0].mxu0 %v1583
  %v2766 = vpop.f32.mrb[0].mxu0
  %v2767 = vadd.f32 %v2390, %v2766
  %v2768 = vpop.f32.mrb[0].mxu0
  %2769 = vmatprep.mubr.f32.mxu0 0.0
  %2770 = vmatmul.mubr.f32.gmra.mrb[0].mxu0 %v1584
  %v2771 = vpop.f32.mrb[0].mxu0
  %v2772 = vadd.f32 %v2395, %v2771
  %v2773 = vpop.f32.mrb[0].mxu0
  %2774 = vmatprep.mubr.f32.mxu0 0.0
  %2775 = vmatmul.mubr.f32.gmra.mrb[0].mxu0 %v1585
  %v2776 = vpop.f32.mrb[0].mxu0
  %v2777 = vadd.f32 %v2400, %v2776
  %v2778 = vpop.f32.mrb[0].mxu0
  %2779 = vmatprep.mubr.f32.mxu0 0.0
  %2780 = vmatmul.mubr.f32.gmra.mrb[0].mxu0 %v1586
  %v2781 = vpop.f32.mrb[0].mxu0
  %v2782 = vadd.f32 %v2405, %v2781
  %v2783 = vpop.f32.mrb[0].mxu0
  %2784 = vmatprep.mubr.f32.mxu0 0.0
  %2785 = vmatmul.mubr.f32.gmra.mrb[0].mxu0 %v1587
  %v2786 = vpop.f32.mrb[0].mxu0
  %v2787 = vadd.f32 %v2410, %v2786
  %v2788 = vpop.f32.mrb[0].mxu0
  %2789 = vmatprep.mubr.f32.mxu0 0.0
  %2790 = vmatmul.mubr.f32.gmra.mrb[0].mxu0 %v1588
  %v2791 = vpop.f32.mrb[0].mxu0
  %v2792 = vadd.f32 %v2415, %v2791
  %v2793 = vpop.f32.mrb[0].mxu0
  %2794 = vmatprep.mubr.f32.mxu0 0.0
  %2795 = vmatmul.mubr.f32.gmra.mrb[0].mxu0 %v1589
  %v2796 = vpop.f32.mrb[0].mxu0
  %v2797 = vpop.f32.mrb[0].mxu0
  %2798 = vmatprep.mubr.f32.mxu0 0.0
  %2799 = vmatmul.mubr.f32.gmra.mrb[0].mxu0 %v1590
  %v2800 = vpop.f32.mrb[0].mxu0
  %v2801 = vpop.f32.mrb[0].mxu0
  %2802 = vmatprep.mubr.f32.mxu0 0.0
  %2803 = vmatmul.mubr.f32.gmra.mrb[0].mxu0 %v1591
  %v2804 = vpop.f32.mrb[0].mxu0
  %v2805 = vpop.f32.mrb[0].mxu0
  %2806 = vmatprep.mubr.f32.mxu0 0.0
  %2807 = vmatmul.mubr.f32.gmra.mrb[0].mxu0 %v1592
  %v2808 = vpop.f32.mrb[0].mxu0
  %v2809 = vpop.f32.mrb[0].mxu0
  %2810 = vdwg.mxu0
  %2811 = vst [vmem:[%s3] sm:$0xff] %v2501
  %2812 = vst [vmem:[%s3 + $0x8] sm:$0x3f] %v2506
  %2813 = vst [vmem:[%s3 + $0x10] sm:$0xff] %v2511
  %2814 = vst [vmem:[%s3 + $0x18] sm:$0x3f] %v2516
  %2815 = vst [vmem:[%s3 + $0x20] sm:$0xff] %v2521
  %2816 = vst [vmem:[%s3 + $0x28] sm:$0x3f] %v2526
  %2817 = vst [vmem:[%s3 + $0x30] sm:$0xff] %v2531
  %2818 = vst [vmem:[%s3 + $0x38] sm:$0x3f] %v2536
  %2819 = vst [vmem:[%s3 + $0x40] sm:$0xff] %v2541
  %2820 = vst [vmem:[%s3 + $0x48] sm:$0x3f] %v2546
  %2821 = vst [vmem:[%s3 + $0x50] sm:$0xff] %v2551
  %2822 = vst [vmem:[%s3 + $0x58] sm:$0x3f] %v2556
  %2823 = vst [vmem:[%s3 + $0x60] sm:$0xff] %v2561
  %2824 = vst [vmem:[%s3 + $0x68] sm:$0x3f] %v2566
  %2825 = vst [vmem:[%s3 + $0x70] sm:$0xff] %v2571
  %2826 = vst [vmem:[%s3 + $0x78] sm:$0x3f] %v2576
  %2827 = vst [vmem:[%s3 + $0x80] sm:$0xff] %v2581
  %2828 = vst [vmem:[%s3 + $0x88] sm:$0x3f] %v2586
  %2829 = vst [vmem:[%s3 + $0x90] sm:$0xff] %v2591
  %2830 = vst [vmem:[%s3 + $0x98] sm:$0x3f] %v2596
  %2831 = vst [vmem:[%s3 + $0xa0] sm:$0xff] %v2601
  %2832 = vst [vmem:[%s3 + $0xa8] sm:$0x3f] %v2606
  %2833 = vst [vmem:[%s3 + $0xb0] sm:$0xff] %v2611
  %2834 = vst [vmem:[%s3 + $0xb8] sm:$0x3f] %v2616
  %2835 = vst [vmem:[%s3 + $0xc0] sm:$0xff] %v2621
  %2836 = vst [vmem:[%s3 + $0xc8] sm:$0x3f] %v2626
  %2837 = vst [vmem:[%s3 + $0xd0] sm:$0xff] %v2631
  %2838 = vst [vmem:[%s3 + $0xd8] sm:$0x3f] %v2636
  %2839 = vst [vmem:[%s3 + $0xe0] sm:$0xff] %v2657
  %2840 = vst [vmem:[%s3 + $0xe8] sm:$0x3f] %v2662
  %2841 = vst [vmem:[%s3 + $0xf0] sm:$0xff] %v2667
  %2842 = vst [vmem:[%s3 + $0xf8] sm:$0x3f] %v2672
  %2843 = vst [vmem:[%s3 + $0x100] sm:$0xff] %v2677
  %2844 = vst [vmem:[%s3 + $0x108] sm:$0x3f] %v2682
  %2845 = vst [vmem:[%s3 + $0x110] sm:$0xff] %v2687
  %2846 = vst [vmem:[%s3 + $0x118] sm:$0x3f] %v2692
  %2847 = vst [vmem:[%s3 + $0x120] sm:$0xff] %v2697
  %2848 = vst [vmem:[%s3 + $0x128] sm:$0x3f] %v2702
  %2849 = vst [vmem:[%s3 + $0x130] sm:$0xff] %v2707
  %2850 = vst [vmem:[%s3 + $0x138] sm:$0x3f] %v2712
  %2851 = vst [vmem:[%s3 + $0x140] sm:$0xff] %v2717
  %2852 = vst [vmem:[%s3 + $0x148] sm:$0x3f] %v2722
  %2853 = vst [vmem:[%s3 + $0x150] sm:$0xff] %v2727
  %2854 = vst [vmem:[%s3 + $0x158] sm:$0x3f] %v2732
  %2855 = vst [vmem:[%s3 + $0x160] sm:$0xff] %v2737
  %2856 = vst [vmem:[%s3 + $0x168] sm:$0x3f] %v2742
  %2857 = vst [vmem:[%s3 + $0x170] sm:$0xff] %v2747
  %2858 = vst [vmem:[%s3 + $0x178] sm:$0x3f] %v2752
  %2859 = vst [vmem:[%s3 + $0x180] sm:$0xff] %v2757
  %2860 = vst [vmem:[%s3 + $0x188] sm:$0x3f] %v2762
  %2861 = vst [vmem:[%s3 + $0x190] sm:$0xff] %v2767
  %2862 = vst [vmem:[%s3 + $0x198] sm:$0x3f] %v2772
  %2863 = vst [vmem:[%s3 + $0x1a0] sm:$0xff] %v2777
  %2864 = vst [vmem:[%s3 + $0x1a8] sm:$0x3f] %v2782
  %2865 = vst [vmem:[%s3 + $0x1b0] sm:$0xff] %v2787
  %2866 = vst [vmem:[%s3 + $0x1b8] sm:$0x3f] %v2792
  // Predicated region
  $region14: #{conv2d_3x3_valid.1} parent=0 // pred_check
    _
  $region15: #{conv2d_3x3_valid.1} parent=0 // pred_check_branch
    %2868 = sbr.rel (0) target = $region17
  $region16: #{conv2d_3x3_valid.1} parent=0 // pred_region
    _
  $region17: #{conv2d_3x3_valid.1} parent=0 // pred_fallthru
    _
  // Predicated region
  $region18: #{conv2d_3x3_valid.1} parent=0 // pred_check
    _
  $region19: #{conv2d_3x3_valid.1} parent=0 // pred_check_branch
    %2870 = sbr.rel (0) target = $region21
  $region20: #{conv2d_3x3_valid.1} parent=0 // pred_region
    _
  $region21: #{conv2d_3x3_valid.1} parent=0 // pred_fallthru
    _

</llo_original>
